<compile_context>
chip_gen: v7x
topology: tpu7x:2x2x1
jax: 0.10.0
libtpu: 0.0.40
codegen_flags: <defaults>
</compile_context>

<pallas_src>
import functools
import math

import jax
import jax.numpy as jnp
from jax.experimental import pallas as pl
from jax.experimental.pallas import tpu as pltpu


def _round_up(x, m):
    return ((x + m - 1) // m) * m


def _attnpool_kernel(x_ref, posk_ref, posv_ref, wq_ref, qb_ref, wk_ref,
                     wv_ref, wc_ref, bc_ref, sel_ref, selt_ref, o_ref,
                     *, num_heads):
    # x_ref block: (B, C, HW) tile of batch elements in native layout.
    B, C, HW = x_ref.shape
    cdt = wq_ref.dtype                                   # MXU compute dtype (bf16/f32)

    x = x_ref[...].astype(jnp.float32)                   # (B, C, HW)
    # Mean token from the raw input; positional-embedding contributions are
    # pre-projected in the wrapper (pos_k / pos_v / qb), so no seq tensor here.
    mean_raw = jnp.sum(x, axis=2) * (1.0 / HW)           # (B, C)
    # One in-kernel transpose replaces the wrapper's extra HBM layout pass.
    xt = jnp.transpose(x, (0, 2, 1))                     # (B, HW, C)
    rest2 = xt.reshape(B * HW, C)

    mean_c = mean_raw.astype(cdt)
    rest_c = rest2.astype(cdt)

    posk = posk_ref[...]                                 # (HW+1, C) = pos @ Wk^T + bk
    posv = posv_ref[...]                                 # (HW+1, C) = pos @ Wv^T + bv

    # ---- projections: bf16 inputs, f32 MXU accumulation (q-scale folded in) ----
    q = jnp.dot(mean_c, wq_ref[...],
                preferred_element_type=jnp.float32) + qb_ref[...]        # (B, C)
    k_mean = jnp.dot(mean_c, wk_ref[...],
                     preferred_element_type=jnp.float32) + posk[0:1]     # (B, C)
    v_mean = jnp.dot(mean_c, wv_ref[...],
                     preferred_element_type=jnp.float32) + posv[0:1]     # (B, C)
    k_rest = (jnp.dot(rest_c, wk_ref[...],
                      preferred_element_type=jnp.float32).reshape(B, HW, C)
              + posk[1:][None, :, :])                                    # (B, HW, C)
    v_rest = (jnp.dot(rest_c, wv_ref[...],
                      preferred_element_type=jnp.float32).reshape(B, HW, C)
              + posv[1:][None, :, :])                                    # (B, HW, C)

    sel = sel_ref[...]                                   # (C, nh) 0/1 head selector
    selt = selt_ref[...]                                 # (nh, C)

    # ---- per-head scores via selector matmul (tiny FLOPs; MXU has slack) ----
    s_mean = jnp.dot(q * k_mean, sel,
                     preferred_element_type=jnp.float32)                 # (B, nh)
    qk_rest = (q[:, None, :] * k_rest).reshape(B * HW, C)
    s_rest = jnp.dot(qk_rest, sel,
                     preferred_element_type=jnp.float32).reshape(B, HW, num_heads)

    # ---- softmax over the L = 1 + HW key axis ----
    m = jnp.maximum(s_mean, jnp.max(s_rest, axis=1))     # (B, nh)
    p_mean = jnp.exp(s_mean - m)                         # (B, nh)
    p_rest = jnp.exp(s_rest - m[:, None, :])             # (B, HW, nh)
    denom = p_mean + jnp.sum(p_rest, axis=1)             # (B, nh)
    inv = pl.reciprocal(denom, approx=True)              # EUP slot
    inv = inv * (2.0 - denom * inv)                      # Newton step -> ~f32 accuracy

    # ---- expand head probabilities back to channel space, reduce over keys ----
    pm_full = jnp.dot(p_mean * inv, selt,
                      preferred_element_type=jnp.float32)                # (B, C)
    pr = (p_rest * inv[:, None, :]).reshape(B * HW, num_heads)
    pr_full = jnp.dot(pr, selt,
                      preferred_element_type=jnp.float32).reshape(B, HW, C)
    attn = pm_full * v_mean + jnp.sum(pr_full * v_rest, axis=1)          # (B, C)

    out = jnp.dot(attn.astype(cdt), wc_ref[...],
                  preferred_element_type=jnp.float32) + bc_ref[...]      # (B, out_pad)
    o_ref[...] = out.astype(o_ref.dtype)


def _row_vmem_bytes(C, HW, in_itemsize, cdt_itemsize):
    """Rough live-VMEM bytes per batch row inside one grid step."""
    lane = 128
    c_pad = _round_up(C, lane)
    hw_pad = _round_up(HW, lane)
    x_block = 2 * C * hw_pad * in_itemsize               # double-buffered input tile
    f32_tmp = 8 * HW * c_pad * 4                         # xt, k/v_rest, qk, p, pr_full, ...
    cdt_tmp = 3 * HW * c_pad * cdt_itemsize              # bf16 matmul inputs
    vecs = 12 * c_pad * 4                                # (B, C)-sized vectors
    return x_block + f32_tmp + cdt_tmp + vecs


def _weight_vmem_bytes(C, L, out_pad, num_heads, cdt_itemsize):
    lane = 128
    c_pad = _round_up(C, lane)
    nh_pad = _round_up(num_heads, lane)
    cdt = (3 * C * c_pad + C * out_pad) * cdt_itemsize                  # wq/wk/wv/wc
    f32 = (2 * L * c_pad + c_pad + out_pad
           + C * nh_pad + _round_up(num_heads, 8) * c_pad) * 4          # pos/biases/sel
    return 2 * (cdt + f32)                                              # double-buffered


def attention_pool_2d(x, params, num_heads, *, b_tile=256,
                      compute_dtype=jnp.bfloat16,
                      vmem_budget_bytes=40 * 1024 * 1024):
    """x: (N, group_dim, H, W) with H*W == embed_dim.  Returns (N, output_dim)."""
    N, C, H, W = x.shape
    HW = H * W
    L = HW + 1
    out_dim = params["c_w"].shape[0]
    assert C % num_heads == 0
    head_dim = C // num_heads
    scale = 1.0 / math.sqrt(head_dim)
    f32 = jnp.float32
    cdt = compute_dtype

    # Native layout (free reshape): no wrapper transpose / extra HBM pass over x.
    xr = x.reshape(N, C, HW)

    in_isz = jnp.dtype(x.dtype).itemsize
    cdt_isz = jnp.dtype(cdt).itemsize
    out_pad = _round_up(out_dim, 128)                    # lane-dense output store

    # ---- batch tile selection: multiple of 8, >=2 grid steps when possible,
    #      capped by an explicit VMEM-footprint formula (v7x-safe budget) ----
    row_bytes = _row_vmem_bytes(C, HW, in_isz, cdt_isz)
    wgt_bytes = _weight_vmem_bytes(C, L, out_pad, num_heads, cdt_isz)
    fit = max(8, ((vmem_budget_bytes - wgt_bytes) // row_bytes) // 8 * 8)

    bt = max(8, _round_up(min(b_tile, N), 8))
    if N > 8:                                            # v7x has 2 TensorCores
        while -(-N // bt) < 2 and bt > 8:
            bt = max(8, _round_up(bt // 2, 8))
    bt = min(bt, fit)
    n_pad = _round_up(N, bt)
    if n_pad != N:                                       # only the ragged tail, if any
        xr = jnp.pad(xr, ((0, n_pad - N), (0, 0), (0, 0)))

    # ---- weight / positional-embedding preprocessing (tiny, wrapper-side) ----
    q_w = params["q_w"].astype(f32); q_b = params["q_b"].astype(f32)
    k_w = params["k_w"].astype(f32); k_b = params["k_b"].astype(f32)
    v_w = params["v_w"].astype(f32); v_b = params["v_b"].astype(f32)
    c_w = params["c_w"].astype(f32); c_b = params["c_b"].astype(f32)
    pos = params["pos"].astype(f32)                                      # (L, C)

    wq_s = (q_w.T * scale).astype(cdt)                                   # (C, C)
    qb_s = ((pos[0:1] @ q_w.T + q_b[None, :]) * scale).astype(f32)       # (1, C)
    wk_t = k_w.T.astype(cdt)
    wv_t = v_w.T.astype(cdt)
    pos_k = (pos @ k_w.T + k_b[None, :]).astype(f32)                     # (L, C)
    pos_v = (pos @ v_w.T + v_b[None, :]).astype(f32)                     # (L, C)

    wc_pad = jnp.pad(c_w.T, ((0, 0), (0, out_pad - out_dim))).astype(cdt)   # (C, out_pad)
    bc_pad = jnp.pad(c_b[None, :], ((0, 0), (0, out_pad - out_dim)))        # (1, out_pad)

    # 0/1 head-selector matrix: sel[c, h] = 1 iff channel c belongs to head h.
    sel = (jnp.arange(C)[:, None] // head_dim ==
           jnp.arange(num_heads)[None, :]).astype(f32)                   # (C, nh)
    selt = sel.T                                                         # (nh, C)

    kernel = functools.partial(_attnpool_kernel, num_heads=num_heads)

    vmem_limit = int(min(64 * 1024 * 1024,
                         max(32 * 1024 * 1024,
                             wgt_bytes + bt * row_bytes + (4 << 20))))

    out = pl.pallas_call(
        kernel,
        out_shape=jax.ShapeDtypeStruct((n_pad, out_pad), x.dtype),
        grid_spec=pltpu.PrefetchScalarGridSpec(
            num_scalar_prefetch=0,
            grid=(n_pad // bt,),
            in_specs=[
                pl.BlockSpec((bt, C, HW), lambda b: (b, 0, 0)),    # x tile (native layout)
                pl.BlockSpec((L, C), lambda b: (0, 0)),            # pos @ Wk^T + bk
                pl.BlockSpec((L, C), lambda b: (0, 0)),            # pos @ Wv^T + bv
                pl.BlockSpec((C, C), lambda b: (0, 0)),            # Wq^T (scaled, cdt)
                pl.BlockSpec((1, C), lambda b: (0, 0)),            # q bias (scaled, + pos0)
                pl.BlockSpec((C, C), lambda b: (0, 0)),            # Wk^T (cdt)
                pl.BlockSpec((C, C), lambda b: (0, 0)),            # Wv^T (cdt)
                pl.BlockSpec((C, out_pad), lambda b: (0, 0)),      # Wc^T lane-padded (cdt)
                pl.BlockSpec((1, out_pad), lambda b: (0, 0)),      # bc lane-padded
                pl.BlockSpec((C, num_heads), lambda b: (0, 0)),    # Sel
                pl.BlockSpec((num_heads, C), lambda b: (0, 0)),    # Sel^T
            ],
            out_specs=pl.BlockSpec((bt, out_pad), lambda b: (b, 0)),
        ),
        compiler_params=pltpu.CompilerParams(
            dimension_semantics=("parallel",),
            vmem_limit_bytes=vmem_limit),
    )(xr, pos_k, pos_v, wq_s, qb_s, wk_t, wv_t, wc_pad, bc_pad, sel, selt)

    return out[:N, :out_dim]


def reference(x, params, num_heads):
    """Pure-JAX reference mirroring F.multi_head_attention_forward semantics."""
    N, C, H, W = x.shape
    hd = C // num_heads
    seq = x.reshape(N, C, H * W).transpose(2, 0, 1)
    seq = jnp.concatenate([seq.mean(axis=0, keepdims=True), seq], axis=0)  # (L, N, C)
    seq = seq + params["pos"][:, None, :]
    L = seq.shape[0]
    q = seq[:1] @ params["q_w"].T + params["q_b"]                          # (1, N, C)
    k = seq @ params["k_w"].T + params["k_b"]                              # (L, N, C)
    v = seq @ params["v_w"].T + params["v_b"]
    qh = q.reshape(1, N, num_heads, hd).transpose(1, 2, 0, 3)              # (N, nh, 1, hd)
    kh = k.reshape(L, N, num_heads, hd).transpose(1, 2, 0, 3)              # (N, nh, L, hd)
    vh = v.reshape(L, N, num_heads, hd).transpose(1, 2, 0, 3)
    scores = jnp.einsum("nhqd,nhkd->nhqk", qh, kh) / math.sqrt(hd)
    p = jax.nn.softmax(scores, axis=-1)
    o = jnp.einsum("nhqk,nhkd->nhqd", p, vh)                               # (N, nh, 1, hd)
    o = o.transpose(2, 0, 1, 3).reshape(1, N, C)
    return (o @ params["c_w"].T + params["c_b"])[0]                        # (N, Dout)


if __name__ == "__main__":
    # Module hyper-params (small but consistent with the forward's constraints):
    # embed_dim == H*W, group_dim == channel dim, num_heads | group_dim.
    embed_dim = 16        # H*W
    group_dim = 32        # C
    num_heads = 4
    output_dim = 32
    N, H, W = 2, 4, 4

    key = jax.random.PRNGKey(0)
    ks = jax.random.split(key, 11)
    params = {
        "pos": jax.random.normal(ks[0], (embed_dim + 1, group_dim), jnp.float32)
               / embed_dim ** 0.5,
        "q_w": jax.random.normal(ks[1], (group_dim, group_dim), jnp.float32) * 0.1,
        "q_b": jax.random.normal(ks[2], (group_dim,), jnp.float32) * 0.1,
        "k_w": jax.random.normal(ks[3], (group_dim, group_dim), jnp.float32) * 0.1,
        "k_b": jax.random.normal(ks[4], (group_dim,), jnp.float32) * 0.1,
        "v_w": jax.random.normal(ks[5], (group_dim, group_dim), jnp.float32) * 0.1,
        "v_b": jax.random.normal(ks[6], (group_dim,), jnp.float32) * 0.1,
        "c_w": jax.random.normal(ks[7], (output_dim, group_dim), jnp.float32) * 0.1,
        "c_b": jax.random.normal(ks[8], (output_dim,), jnp.float32) * 0.1,
    }
    x = jax.random.normal(ks[9], (N, group_dim, H, W), jnp.float32)
    ref = reference(x, params, num_heads)

    # 1) f32 compute path: tight tolerance vs the JAX reference.
    out_f32 = jax.block_until_ready(
        attention_pool_2d(x, params, num_heads, compute_dtype=jnp.float32))
    assert out_f32.shape == (N, output_dim), out_f32.shape
    if not jnp.allclose(out_f32, ref, atol=1e-3, rtol=1e-3):
        raise AssertionError("Pallas kernel (f32) output mismatch vs JAX reference")

    # 2) Default bf16-MXU path: looser tolerance (bf16 inputs, f32 accumulation).
    out_bf16 = jax.block_until_ready(attention_pool_2d(x, params, num_heads))
    if not jnp.allclose(out_bf16, ref, atol=5e-2, rtol=5e-2):
        raise AssertionError("Pallas kernel (bf16) output mismatch vs JAX reference")

    # 3) Ragged batch: exercises batch padding, the >=2-step grid rule, tiling.
    x2 = jax.random.normal(ks[10], (10, group_dim, H, W), jnp.float32)
    out2 = jax.block_until_ready(
        attention_pool_2d(x2, params, num_heads, b_tile=8, compute_dtype=jnp.float32))
    ref2 = reference(x2, params, num_heads)
    if not jnp.allclose(out2, ref2, atol=1e-3, rtol=1e-3):
        raise AssertionError("Pallas kernel output mismatch vs JAX reference (tiled grid)")

    print("KERNEL_OK")
</pallas_src>

<mosaic_0001>
module attributes {stable_mosaic.version = 11 : i64} {
  func.func @_attnpool_kernel(%arg0: i32, %arg1: memref<8x32x16xf32, #tpu.memory_space<vmem>>, %arg2: memref<17x32xf32, #tpu.memory_space<vmem>>, %arg3: memref<17x32xf32, #tpu.memory_space<vmem>>, %arg4: memref<32x32xf32, #tpu.memory_space<vmem>>, %arg5: memref<1x32xf32, #tpu.memory_space<vmem>>, %arg6: memref<32x32xf32, #tpu.memory_space<vmem>>, %arg7: memref<32x32xf32, #tpu.memory_space<vmem>>, %arg8: memref<32x128xf32, #tpu.memory_space<vmem>>, %arg9: memref<1x128xf32, #tpu.memory_space<vmem>>, %arg10: memref<32x4xf32, #tpu.memory_space<vmem>>, %arg11: memref<4x32xf32, #tpu.memory_space<vmem>>, %arg12: memref<8x128xf32, #tpu.memory_space<vmem>>) attributes {dimension_semantics = [#tpu.dimension_semantics<parallel>], iteration_bounds = array<i64: 1>, scalar_prefetch = 0 : i64, scratch_operands = 0 : i64, tpu.core_type = #tpu.core_type<tc>, window_params = [{transform_indices = @transform_0, window_bounds = array<i64: 8, 32, 16>}, {pipeline_mode = #tpu.pipeline_mode<synchronous>, transform_indices = @transform_1, window_bounds = array<i64: 17, 32>}, {pipeline_mode = #tpu.pipeline_mode<synchronous>, transform_indices = @transform_2, window_bounds = array<i64: 17, 32>}, {pipeline_mode = #tpu.pipeline_mode<synchronous>, transform_indices = @transform_3, window_bounds = array<i64: 32, 32>}, {pipeline_mode = #tpu.pipeline_mode<synchronous>, transform_indices = @transform_4, window_bounds = array<i64: 1, 32>}, {pipeline_mode = #tpu.pipeline_mode<synchronous>, transform_indices = @transform_5, window_bounds = array<i64: 32, 32>}, {pipeline_mode = #tpu.pipeline_mode<synchronous>, transform_indices = @transform_6, window_bounds = array<i64: 32, 32>}, {pipeline_mode = #tpu.pipeline_mode<synchronous>, transform_indices = @transform_7, window_bounds = array<i64: 32, 128>}, {pipeline_mode = #tpu.pipeline_mode<synchronous>, transform_indices = @transform_8, window_bounds = array<i64: 1, 128>}, {pipeline_mode = #tpu.pipeline_mode<synchronous>, transform_indices = @transform_9, window_bounds = array<i64: 32, 4>}, {pipeline_mode = #tpu.pipeline_mode<synchronous>, transform_indices = @transform_10, window_bounds = array<i64: 4, 32>}, {transform_indices = @transform_11, window_bounds = array<i64: 8, 128>}]} {
    %c0 = arith.constant 0 : index
    %c0_0 = arith.constant 0 : index
    %c0_1 = arith.constant 0 : index
    %0 = vector.load %arg1[%c0, %c0_0, %c0_1] : memref<8x32x16xf32, #tpu.memory_space<vmem>>, vector<8x32x16xf32>
    %cst = arith.constant dense<0.000000e+00> : vector<8x32xf32>
    %1 = vector.multi_reduction <add>, %0, %cst [2] : vector<8x32x16xf32> to vector<8x32xf32>
    %cst_2 = arith.constant 6.250000e-02 : f32
    %2 = vector.broadcast %cst_2 : f32 to vector<8x32xf32>
    %3 = arith.mulf %1, %2 : vector<8x32xf32>
    %4 = tpu.transpose %0, [0, 2, 1] : vector<8x32x16xf32> -> vector<8x16x32xf32>
    %5 = vector.shape_cast %4 : vector<8x16x32xf32> to vector<128x32xf32>
    %c0_3 = arith.constant 0 : index
    %c0_4 = arith.constant 0 : index
    %6 = vector.load %arg2[%c0_3, %c0_4] : memref<17x32xf32, #tpu.memory_space<vmem>>, vector<17x32xf32>
    %c0_5 = arith.constant 0 : index
    %c0_6 = arith.constant 0 : index
    %7 = vector.load %arg3[%c0_5, %c0_6] : memref<17x32xf32, #tpu.memory_space<vmem>>, vector<17x32xf32>
    %c0_7 = arith.constant 0 : index
    %c0_8 = arith.constant 0 : index
    %8 = vector.load %arg4[%c0_7, %c0_8] : memref<32x32xf32, #tpu.memory_space<vmem>>, vector<32x32xf32>
    %cst_9 = arith.constant dense<0.000000e+00> : vector<8x32xf32>
    %9 = tpu.matmul %3, %8, %cst_9 {dimension_numbers = #tpu.dot_dimension_numbers<[1], [0], [0], [1], [0, 0, 1, 1], [], []>} : vector<8x32xf32>, vector<32x32xf32>, vector<8x32xf32> -> vector<8x32xf32>
    %c0_10 = arith.constant 0 : index
    %c0_11 = arith.constant 0 : index
    %10 = vector.load %arg5[%c0_10, %c0_11] : memref<1x32xf32, #tpu.memory_space<vmem>>, vector<1x32xf32>
    %11 = vector.broadcast %10 : vector<1x32xf32> to vector<8x32xf32>
    %12 = arith.addf %9, %11 : vector<8x32xf32>
    %c0_12 = arith.constant 0 : index
    %c0_13 = arith.constant 0 : index
    %13 = vector.load %arg6[%c0_12, %c0_13] : memref<32x32xf32, #tpu.memory_space<vmem>>, vector<32x32xf32>
    %cst_14 = arith.constant dense<0.000000e+00> : vector<8x32xf32>
    %14 = tpu.matmul %3, %13, %cst_14 {dimension_numbers = #tpu.dot_dimension_numbers<[1], [0], [0], [1], [0, 0, 1, 1], [], []>} : vector<8x32xf32>, vector<32x32xf32>, vector<8x32xf32> -> vector<8x32xf32>
    %15 = vector.extract_strided_slice %6 {offsets = [0, 0], sizes = [1, 32], strides = [1, 1]} : vector<17x32xf32> to vector<1x32xf32>
    %16 = vector.broadcast %15 : vector<1x32xf32> to vector<8x32xf32>
    %17 = arith.addf %14, %16 : vector<8x32xf32>
    %c0_15 = arith.constant 0 : index
    %c0_16 = arith.constant 0 : index
    %18 = vector.load %arg7[%c0_15, %c0_16] : memref<32x32xf32, #tpu.memory_space<vmem>>, vector<32x32xf32>
    %cst_17 = arith.constant dense<0.000000e+00> : vector<8x32xf32>
    %19 = tpu.matmul %3, %18, %cst_17 {dimension_numbers = #tpu.dot_dimension_numbers<[1], [0], [0], [1], [0, 0, 1, 1], [], []>} : vector<8x32xf32>, vector<32x32xf32>, vector<8x32xf32> -> vector<8x32xf32>
    %20 = vector.extract_strided_slice %7 {offsets = [0, 0], sizes = [1, 32], strides = [1, 1]} : vector<17x32xf32> to vector<1x32xf32>
    %21 = vector.broadcast %20 : vector<1x32xf32> to vector<8x32xf32>
    %22 = arith.addf %19, %21 : vector<8x32xf32>
    %c0_18 = arith.constant 0 : index
    %c0_19 = arith.constant 0 : index
    %23 = vector.load %arg6[%c0_18, %c0_19] : memref<32x32xf32, #tpu.memory_space<vmem>>, vector<32x32xf32>
    %cst_20 = arith.constant dense<0.000000e+00> : vector<128x32xf32>
    %24 = tpu.matmul %5, %23, %cst_20 {dimension_numbers = #tpu.dot_dimension_numbers<[1], [0], [0], [1], [0, 0, 1, 1], [], []>} : vector<128x32xf32>, vector<32x32xf32>, vector<128x32xf32> -> vector<128x32xf32>
    %25 = vector.shape_cast %24 : vector<128x32xf32> to vector<8x16x32xf32>
    %26 = vector.extract_strided_slice %6 {offsets = [1, 0], sizes = [16, 32], strides = [1, 1]} : vector<17x32xf32> to vector<16x32xf32>
    %27 = vector.shape_cast %26 : vector<16x32xf32> to vector<1x16x32xf32>
    %28 = vector.broadcast %27 : vector<1x16x32xf32> to vector<8x16x32xf32>
    %29 = arith.addf %25, %28 : vector<8x16x32xf32>
    %c0_21 = arith.constant 0 : index
    %c0_22 = arith.constant 0 : index
    %30 = vector.load %arg7[%c0_21, %c0_22] : memref<32x32xf32, #tpu.memory_space<vmem>>, vector<32x32xf32>
    %cst_23 = arith.constant dense<0.000000e+00> : vector<128x32xf32>
    %31 = tpu.matmul %5, %30, %cst_23 {dimension_numbers = #tpu.dot_dimension_numbers<[1], [0], [0], [1], [0, 0, 1, 1], [], []>} : vector<128x32xf32>, vector<32x32xf32>, vector<128x32xf32> -> vector<128x32xf32>
    %32 = vector.shape_cast %31 : vector<128x32xf32> to vector<8x16x32xf32>
    %33 = vector.extract_strided_slice %7 {offsets = [1, 0], sizes = [16, 32], strides = [1, 1]} : vector<17x32xf32> to vector<16x32xf32>
    %34 = vector.shape_cast %33 : vector<16x32xf32> to vector<1x16x32xf32>
    %35 = vector.broadcast %34 : vector<1x16x32xf32> to vector<8x16x32xf32>
    %36 = arith.addf %32, %35 : vector<8x16x32xf32>
    %c0_24 = arith.constant 0 : index
    %c0_25 = arith.constant 0 : index
    %37 = vector.load %arg10[%c0_24, %c0_25] : memref<32x4xf32, #tpu.memory_space<vmem>>, vector<32x4xf32>
    %c0_26 = arith.constant 0 : index
    %c0_27 = arith.constant 0 : index
    %38 = vector.load %arg11[%c0_26, %c0_27] : memref<4x32xf32, #tpu.memory_space<vmem>>, vector<4x32xf32>
    %39 = arith.mulf %12, %17 : vector<8x32xf32>
    %cst_28 = arith.constant dense<0.000000e+00> : vector<8x4xf32>
    %40 = tpu.matmul %39, %37, %cst_28 {dimension_numbers = #tpu.dot_dimension_numbers<[1], [0], [0], [1], [0, 0, 1, 1], [], []>} : vector<8x32xf32>, vector<32x4xf32>, vector<8x4xf32> -> vector<8x4xf32>
    %41 = vector.shape_cast %12 : vector<8x32xf32> to vector<8x1x32xf32>
    %42 = vector.broadcast %41 : vector<8x1x32xf32> to vector<8x16x32xf32>
    %43 = arith.mulf %42, %29 : vector<8x16x32xf32>
    %44 = vector.shape_cast %43 : vector<8x16x32xf32> to vector<128x32xf32>
    %cst_29 = arith.constant dense<0.000000e+00> : vector<128x4xf32>
    %45 = tpu.matmul %44, %37, %cst_29 {dimension_numbers = #tpu.dot_dimension_numbers<[1], [0], [0], [1], [0, 0, 1, 1], [], []>} : vector<128x32xf32>, vector<32x4xf32>, vector<128x4xf32> -> vector<128x4xf32>
    %46 = vector.shape_cast %45 : vector<128x4xf32> to vector<8x16x4xf32>
    %cst_30 = arith.constant dense<0xFF800000> : vector<8x4xf32>
    %47 = vector.multi_reduction <maximumf>, %46, %cst_30 [1] : vector<8x16x4xf32> to vector<8x4xf32>
    %48 = arith.maximumf %40, %47 : vector<8x4xf32>
    %49 = arith.subf %40, %48 : vector<8x4xf32>
    %50 = math.exp %49 : vector<8x4xf32>
    %51 = vector.shape_cast %48 : vector<8x4xf32> to vector<8x1x4xf32>
    %52 = vector.broadcast %51 : vector<8x1x4xf32> to vector<8x16x4xf32>
    %53 = arith.subf %46, %52 : vector<8x16x4xf32>
    %54 = math.exp %53 : vector<8x16x4xf32>
    %cst_31 = arith.constant dense<0.000000e+00> : vector<8x4xf32>
    %55 = vector.multi_reduction <add>, %54, %cst_31 [1] : vector<8x16x4xf32> to vector<8x4xf32>
    %56 = arith.addf %50, %55 : vector<8x4xf32>
    %57 = tpu.reciprocal %56 {approx = true} : vector<8x4xf32> -> vector<8x4xf32>
    %58 = arith.mulf %56, %57 : vector<8x4xf32>
    %cst_32 = arith.constant 2.000000e+00 : f32
    %59 = vector.broadcast %cst_32 : f32 to vector<8x4xf32>
    %60 = arith.subf %59, %58 : vector<8x4xf32>
    %61 = arith.mulf %57, %60 : vector<8x4xf32>
    %62 = arith.mulf %50, %61 : vector<8x4xf32>
    %cst_33 = arith.constant dense<0.000000e+00> : vector<8x32xf32>
    %63 = tpu.matmul %62, %38, %cst_33 {dimension_numbers = #tpu.dot_dimension_numbers<[1], [0], [0], [1], [0, 0, 1, 1], [], []>} : vector<8x4xf32>, vector<4x32xf32>, vector<8x32xf32> -> vector<8x32xf32>
    %64 = vector.shape_cast %61 : vector<8x4xf32> to vector<8x1x4xf32>
    %65 = vector.broadcast %64 : vector<8x1x4xf32> to vector<8x16x4xf32>
    %66 = arith.mulf %54, %65 : vector<8x16x4xf32>
    %67 = vector.shape_cast %66 : vector<8x16x4xf32> to vector<128x4xf32>
    %cst_34 = arith.constant dense<0.000000e+00> : vector<128x32xf32>
    %68 = tpu.matmul %67, %38, %cst_34 {dimension_numbers = #tpu.dot_dimension_numbers<[1], [0], [0], [1], [0, 0, 1, 1], [], []>} : vector<128x4xf32>, vector<4x32xf32>, vector<128x32xf32> -> vector<128x32xf32>
    %69 = vector.shape_cast %68 : vector<128x32xf32> to vector<8x16x32xf32>
    %70 = arith.mulf %63, %22 : vector<8x32xf32>
    %71 = arith.mulf %69, %36 : vector<8x16x32xf32>
    %cst_35 = arith.constant dense<0.000000e+00> : vector<8x32xf32>
    %72 = vector.multi_reduction <add>, %71, %cst_35 [1] : vector<8x16x32xf32> to vector<8x32xf32>
    %73 = arith.addf %70, %72 : vector<8x32xf32>
    %c0_36 = arith.constant 0 : index
    %c0_37 = arith.constant 0 : index
    %74 = vector.load %arg8[%c0_36, %c0_37] : memref<32x128xf32, #tpu.memory_space<vmem>>, vector<32x128xf32>
    %cst_38 = arith.constant dense<0.000000e+00> : vector<8x128xf32>
    %75 = tpu.matmul %73, %74, %cst_38 {dimension_numbers = #tpu.dot_dimension_numbers<[1], [0], [0], [1], [0, 0, 1, 1], [], []>} : vector<8x32xf32>, vector<32x128xf32>, vector<8x128xf32> -> vector<8x128xf32>
    %c0_39 = arith.constant 0 : index
    %c0_40 = arith.constant 0 : index
    %76 = vector.load %arg9[%c0_39, %c0_40] : memref<1x128xf32, #tpu.memory_space<vmem>>, vector<1x128xf32>
    %77 = vector.broadcast %76 : vector<1x128xf32> to vector<8x128xf32>
    %78 = arith.addf %75, %77 : vector<8x128xf32>
    %c0_41 = arith.constant 0 : index
    %c0_42 = arith.constant 0 : index
    %79 = vector.load %arg12[%c0_41, %c0_42] : memref<8x128xf32, #tpu.memory_space<vmem>>, vector<8x128xf32>
    tpu.vector_store %arg12[%c0_41, %c0_42], %78 {strides = array<i32>} : memref<8x128xf32, #tpu.memory_space<vmem>>, vector<8x128xf32>,
    return
  }
  func.func @transform_0(%arg0: i32) -> (i32, i32, i32) {
    %c0_i32 = arith.constant 0 : i32
    %c0_i32_0 = arith.constant 0 : i32
    %c0_i32_1 = arith.constant 0 : i32
    return %arg0, %c0_i32, %c0_i32_0 : i32, i32, i32
  }
  func.func @transform_1(%arg0: i32) -> (i32, i32) {
    %c0_i32 = arith.constant 0 : i32
    %c0_i32_0 = arith.constant 0 : i32
    %c0_i32_1 = arith.constant 0 : i32
    return %c0_i32, %c0_i32_0 : i32, i32
  }
  func.func @transform_2(%arg0: i32) -> (i32, i32) {
    %c0_i32 = arith.constant 0 : i32
    %c0_i32_0 = arith.constant 0 : i32
    %c0_i32_1 = arith.constant 0 : i32
    return %c0_i32, %c0_i32_0 : i32, i32
  }
  func.func @transform_3(%arg0: i32) -> (i32, i32) {
    %c0_i32 = arith.constant 0 : i32
    %c0_i32_0 = arith.constant 0 : i32
    %c0_i32_1 = arith.constant 0 : i32
    return %c0_i32, %c0_i32_0 : i32, i32
  }
  func.func @transform_4(%arg0: i32) -> (i32, i32) {
    %c0_i32 = arith.constant 0 : i32
    %c0_i32_0 = arith.constant 0 : i32
    %c0_i32_1 = arith.constant 0 : i32
    return %c0_i32, %c0_i32_0 : i32, i32
  }
  func.func @transform_5(%arg0: i32) -> (i32, i32) {
    %c0_i32 = arith.constant 0 : i32
    %c0_i32_0 = arith.constant 0 : i32
    %c0_i32_1 = arith.constant 0 : i32
    return %c0_i32, %c0_i32_0 : i32, i32
  }
  func.func @transform_6(%arg0: i32) -> (i32, i32) {
    %c0_i32 = arith.constant 0 : i32
    %c0_i32_0 = arith.constant 0 : i32
    %c0_i32_1 = arith.constant 0 : i32
    return %c0_i32, %c0_i32_0 : i32, i32
  }
  func.func @transform_7(%arg0: i32) -> (i32, i32) {
    %c0_i32 = arith.constant 0 : i32
    %c0_i32_0 = arith.constant 0 : i32
    %c0_i32_1 = arith.constant 0 : i32
    return %c0_i32, %c0_i32_0 : i32, i32
  }
  func.func @transform_8(%arg0: i32) -> (i32, i32) {
    %c0_i32 = arith.constant 0 : i32
    %c0_i32_0 = arith.constant 0 : i32
    %c0_i32_1 = arith.constant 0 : i32
    return %c0_i32, %c0_i32_0 : i32, i32
  }
  func.func @transform_9(%arg0: i32) -> (i32, i32) {
    %c0_i32 = arith.constant 0 : i32
    %c0_i32_0 = arith.constant 0 : i32
    %c0_i32_1 = arith.constant 0 : i32
    return %c0_i32, %c0_i32_0 : i32, i32
  }
  func.func @transform_10(%arg0: i32) -> (i32, i32) {
    %c0_i32 = arith.constant 0 : i32
    %c0_i32_0 = arith.constant 0 : i32
    %c0_i32_1 = arith.constant 0 : i32
    return %c0_i32, %c0_i32_0 : i32, i32
  }
  func.func @transform_11(%arg0: i32) -> (i32, i32) {
    %c0_i32 = arith.constant 0 : i32
    %c0_i32_0 = arith.constant 0 : i32
    return %arg0, %c0_i32 : i32, i32
  }
}

</mosaic_0001>

<llo_original>
// kernel: tpu_custom_call.1
$region0: #{tpu_custom_call.1}
  #allocation0 [shape = 'u32[]', space=smem, size = 0x4, offset = 0x4, fixed_abs, tag = 'smem constant byte address 0x4 - core index']
  #allocation1 [shape = 'u32[144,128]{1,0:T(1,128)}', space=vmem, size = 0x12000, scoped, tag = 'internal scratch']
  %s0 = inlined_call_operand.vmem [shape: f32[8,32,16], index: 0, kind: input, shape index: {}]
  %s1 = inlined_call_operand.vmem [shape: f32[17,32], index: 1, kind: input, shape index: {}]
  %s2 = inlined_call_operand.vmem [shape: f32[17,32], index: 2, kind: input, shape index: {}]
  %s3 = inlined_call_operand.vmem [shape: f32[32,32], index: 3, kind: input, shape index: {}]
  %s4 = inlined_call_operand.vmem [shape: f32[1,32], index: 4, kind: input, shape index: {}]
  %s5 = inlined_call_operand.vmem [shape: f32[32,32], index: 5, kind: input, shape index: {}]
  %s6 = inlined_call_operand.vmem [shape: f32[32,32], index: 6, kind: input, shape index: {}]
  %s7 = inlined_call_operand.vmem [shape: f32[32,128], index: 7, kind: input, shape index: {}]
  %s8 = inlined_call_operand.vmem [shape: f32[1,128], index: 8, kind: input, shape index: {}]
  %s9 = inlined_call_operand.vmem [shape: f32[32,4], index: 9, kind: input, shape index: {}]
  %s10 = inlined_call_operand.vmem [shape: f32[4,32], index: 10, kind: input, shape index: {}]
  %s11 = inlined_call_operand.hbm [shape: f32[8,128], index: 11, kind: output, shape index: {}]
  %s12 = sld [smem:[#allocation0]]
  $region54: #{tpu_custom_call.1} parent=0
    _
  %s14 = ssub.s32 1, %s12
  %s15 = scalar_select 0, %s14, %s12
  $region1: #{tpu_custom_call.1} parent=0
    #allocation2 [shape = 'u8[4096]{0}', space=vmem, size = 0x1000, scoped, tag = 'output window, operand 0, single buffered']
    #allocation3 [shape = 's32[1]{0}', space=sflag, size = 0x4, scoped, tag = 'scoped memory for tpu_custom_call.1']
    %16 = vsyncpa [#allocation3], 0
    // Predicated region
    $region2: #{tpu_custom_call.1} parent=1 // pred_check
      _
    $region3: #{tpu_custom_call.1} parent=1 // pred_check_branch
      %18 = sbr.rel (0) target = $region5
    $region4: #{tpu_custom_call.1} parent=1 // pred_region
      _
    $region5: #{tpu_custom_call.1} parent=1 // pred_fallthru
      _
    // Predicated region
    $region6: #{tpu_custom_call.1} parent=1 // pred_check
      _
    $region7: #{tpu_custom_call.1} parent=1 // pred_check_branch
      %20 = sbr.rel (0) target = $region9
    $region8: #{tpu_custom_call.1} parent=1 // pred_region
      _
    $region9: #{tpu_custom_call.1} parent=1 // pred_fallthru
      _
    // Predicated region
    $region10: #{tpu_custom_call.1} parent=1 // pred_check
      _
    $region11: #{tpu_custom_call.1} parent=1 // pred_check_branch
      %22 = sbr.rel (0) target = $region13
    $region12: #{tpu_custom_call.1} parent=1 // pred_region
      _
    $region13: #{tpu_custom_call.1} parent=1 // pred_fallthru
      _
    // Predicated region
    $region14: #{tpu_custom_call.1} parent=1 // pred_check
      _
    $region15: #{tpu_custom_call.1} parent=1 // pred_check_branch
      %24 = sbr.rel (0) target = $region17
    $region16: #{tpu_custom_call.1} parent=1 // pred_region
      _
    $region17: #{tpu_custom_call.1} parent=1 // pred_fallthru
      _
    // Predicated region
    $region18: #{tpu_custom_call.1} parent=1 // pred_check
      _
    $region19: #{tpu_custom_call.1} parent=1 // pred_check_branch
      %26 = sbr.rel (0) target = $region21
    $region20: #{tpu_custom_call.1} parent=1 // pred_region
      _
    $region21: #{tpu_custom_call.1} parent=1 // pred_fallthru
      _
    // Predicated region
    $region22: #{tpu_custom_call.1} parent=1 // pred_check
      _
    $region23: #{tpu_custom_call.1} parent=1 // pred_check_branch
      %28 = sbr.rel (0) target = $region25
    $region24: #{tpu_custom_call.1} parent=1 // pred_region
      _
    $region25: #{tpu_custom_call.1} parent=1 // pred_fallthru
      _
    // Predicated region
    $region26: #{tpu_custom_call.1} parent=1 // pred_check
      _
    $region27: #{tpu_custom_call.1} parent=1 // pred_check_branch
      %30 = sbr.rel (0) target = $region29
    $region28: #{tpu_custom_call.1} parent=1 // pred_region
      _
    $region29: #{tpu_custom_call.1} parent=1 // pred_fallthru
      _
    // Predicated region
    $region30: #{tpu_custom_call.1} parent=1 // pred_check
      _
    $region31: #{tpu_custom_call.1} parent=1 // pred_check_branch
      %32 = sbr.rel (0) target = $region33
    $region32: #{tpu_custom_call.1} parent=1 // pred_region
      _
    $region33: #{tpu_custom_call.1} parent=1 // pred_fallthru
      _
    // Predicated region
    $region34: #{tpu_custom_call.1} parent=1 // pred_check
      _
    $region35: #{tpu_custom_call.1} parent=1 // pred_check_branch
      %34 = sbr.rel (0) target = $region37
    $region36: #{tpu_custom_call.1} parent=1 // pred_region
      _
    $region37: #{tpu_custom_call.1} parent=1 // pred_fallthru
      _
    // Predicated region
    $region38: #{tpu_custom_call.1} parent=1 // pred_check
      _
    $region39: #{tpu_custom_call.1} parent=1 // pred_check_branch
      %36 = sbr.rel (0) target = $region41
    $region40: #{tpu_custom_call.1} parent=1 // pred_region
      _
    $region41: #{tpu_custom_call.1} parent=1 // pred_fallthru
      _
    // Predicated region
    $region42: #{tpu_custom_call.1} parent=1 // pred_check
      _
    $region43: #{tpu_custom_call.1} parent=1 // pred_check_branch
      %38 = sbr.rel (0) target = $region45
    $region44: #{tpu_custom_call.1} parent=1 // pred_region
      _
    $region45: #{tpu_custom_call.1} parent=1 // pred_fallthru
      _
    %v39 = vld [vmem:[%s0] sm:$0xff]
    %v40 = vld [vmem:[%s0 + $0x8] sm:$0xff]
    %v41 = vld [vmem:[%s0 + $0x10] sm:$0xff]
    %v42 = vld [vmem:[%s0 + $0x18] sm:$0xff]
    %v43 = vld [vmem:[%s0 + $0x20] sm:$0xff]
    %v44 = vld [vmem:[%s0 + $0x28] sm:$0xff]
    %v45 = vld [vmem:[%s0 + $0x30] sm:$0xff]
    %v46 = vld [vmem:[%s0 + $0x38] sm:$0xff]
    %v47 = vld [vmem:[%s0 + $0x40] sm:$0xff]
    %v48 = vld [vmem:[%s0 + $0x48] sm:$0xff]
    %v49 = vld [vmem:[%s0 + $0x50] sm:$0xff]
    %v50 = vld [vmem:[%s0 + $0x58] sm:$0xff]
    %v51 = vld [vmem:[%s0 + $0x60] sm:$0xff]
    %v52 = vld [vmem:[%s0 + $0x68] sm:$0xff]
    %v53 = vld [vmem:[%s0 + $0x70] sm:$0xff]
    %v54 = vld [vmem:[%s0 + $0x78] sm:$0xff]
    %v55 = vld [vmem:[%s0 + $0x80] sm:$0xff]
    %v56 = vld [vmem:[%s0 + $0x88] sm:$0xff]
    %v57 = vld [vmem:[%s0 + $0x90] sm:$0xff]
    %v58 = vld [vmem:[%s0 + $0x98] sm:$0xff]
    %v59 = vld [vmem:[%s0 + $0xa0] sm:$0xff]
    %v60 = vld [vmem:[%s0 + $0xa8] sm:$0xff]
    %v61 = vld [vmem:[%s0 + $0xb0] sm:$0xff]
    %v62 = vld [vmem:[%s0 + $0xb8] sm:$0xff]
    %v63 = vld [vmem:[%s0 + $0xc0] sm:$0xff]
    %v64 = vld [vmem:[%s0 + $0xc8] sm:$0xff]
    %v65 = vld [vmem:[%s0 + $0xd0] sm:$0xff]
    %v66 = vld [vmem:[%s0 + $0xd8] sm:$0xff]
    %v67 = vld [vmem:[%s0 + $0xe0] sm:$0xff]
    %v68 = vld [vmem:[%s0 + $0xe8] sm:$0xff]
    %v69 = vld [vmem:[%s0 + $0xf0] sm:$0xff]
    %v70 = vld [vmem:[%s0 + $0xf8] sm:$0xff]
    %vm71 = vcmask 130048
    %v72 = vsel %vm71, %v39, 0.0
    %73 = vadd.xlane.f32.xlu0 %v72
    %v74 = vpop.xlane.xlu0 %73
    %v75 = vsel %vm71, %v40, 0.0
    %76 = vadd.xlane.f32.xlu0 %v75
    %v77 = vpop.xlane.xlu0 %76
    %v78 = vsel %vm71, %v41, 0.0
    %79 = vadd.xlane.f32.xlu0 %v78
    %v80 = vpop.xlane.xlu0 %79
    %v81 = vsel %vm71, %v42, 0.0
    %82 = vadd.xlane.f32.xlu0 %v81
    %v83 = vpop.xlane.xlu0 %82
    %v84 = vsel %vm71, %v43, 0.0
    %85 = vadd.xlane.f32.xlu0 %v84
    %v86 = vpop.xlane.xlu0 %85
    %v87 = vsel %vm71, %v44, 0.0
    %88 = vadd.xlane.f32.xlu0 %v87
    %v89 = vpop.xlane.xlu0 %88
    %v90 = vsel %vm71, %v45, 0.0
    %91 = vadd.xlane.f32.xlu0 %v90
    %v92 = vpop.xlane.xlu0 %91
    %v93 = vsel %vm71, %v46, 0.0
    %94 = vadd.xlane.f32.xlu0 %v93
    %v95 = vpop.xlane.xlu0 %94
    %v96 = vsel %vm71, %v47, 0.0
    %97 = vadd.xlane.f32.xlu0 %v96
    %v98 = vpop.xlane.xlu0 %97
    %v99 = vsel %vm71, %v48, 0.0
    %100 = vadd.xlane.f32.xlu0 %v99
    %v101 = vpop.xlane.xlu0 %100
    %v102 = vsel %vm71, %v49, 0.0
    %103 = vadd.xlane.f32.xlu0 %v102
    %v104 = vpop.xlane.xlu0 %103
    %v105 = vsel %vm71, %v50, 0.0
    %106 = vadd.xlane.f32.xlu0 %v105
    %v107 = vpop.xlane.xlu0 %106
    %v108 = vsel %vm71, %v51, 0.0
    %109 = vadd.xlane.f32.xlu0 %v108
    %v110 = vpop.xlane.xlu0 %109
    %v111 = vsel %vm71, %v52, 0.0
    %112 = vadd.xlane.f32.xlu0 %v111
    %v113 = vpop.xlane.xlu0 %112
    %v114 = vsel %vm71, %v53, 0.0
    %115 = vadd.xlane.f32.xlu0 %v114
    %v116 = vpop.xlane.xlu0 %115
    %v117 = vsel %vm71, %v54, 0.0
    %118 = vadd.xlane.f32.xlu0 %v117
    %v119 = vpop.xlane.xlu0 %118
    %v120 = vsel %vm71, %v55, 0.0
    %121 = vadd.xlane.f32.xlu0 %v120
    %v122 = vpop.xlane.xlu0 %121
    %v123 = vsel %vm71, %v56, 0.0
    %124 = vadd.xlane.f32.xlu0 %v123
    %v125 = vpop.xlane.xlu0 %124
    %v126 = vsel %vm71, %v57, 0.0
    %127 = vadd.xlane.f32.xlu0 %v126
    %v128 = vpop.xlane.xlu0 %127
    %v129 = vsel %vm71, %v58, 0.0
    %130 = vadd.xlane.f32.xlu0 %v129
    %v131 = vpop.xlane.xlu0 %130
    %v132 = vsel %vm71, %v59, 0.0
    %133 = vadd.xlane.f32.xlu0 %v132
    %v134 = vpop.xlane.xlu0 %133
    %v135 = vsel %vm71, %v60, 0.0
    %136 = vadd.xlane.f32.xlu0 %v135
    %v137 = vpop.xlane.xlu0 %136
    %v138 = vsel %vm71, %v61, 0.0
    %139 = vadd.xlane.f32.xlu0 %v138
    %v140 = vpop.xlane.xlu0 %139
    %v141 = vsel %vm71, %v62, 0.0
    %142 = vadd.xlane.f32.xlu0 %v141
    %v143 = vpop.xlane.xlu0 %142
    %v144 = vsel %vm71, %v63, 0.0
    %145 = vadd.xlane.f32.xlu0 %v144
    %v146 = vpop.xlane.xlu0 %145
    %v147 = vsel %vm71, %v64, 0.0
    %148 = vadd.xlane.f32.xlu0 %v147
    %v149 = vpop.xlane.xlu0 %148
    %v150 = vsel %vm71, %v65, 0.0
    %151 = vadd.xlane.f32.xlu0 %v150
    %v152 = vpop.xlane.xlu0 %151
    %v153 = vsel %vm71, %v66, 0.0
    %154 = vadd.xlane.f32.xlu0 %v153
    %v155 = vpop.xlane.xlu0 %154
    %v156 = vsel %vm71, %v67, 0.0
    %157 = vadd.xlane.f32.xlu0 %v156
    %v158 = vpop.xlane.xlu0 %157
    %v159 = vsel %vm71, %v68, 0.0
    %160 = vadd.xlane.f32.xlu0 %v159
    %v161 = vpop.xlane.xlu0 %160
    %v162 = vsel %vm71, %v69, 0.0
    %163 = vadd.xlane.f32.xlu0 %v162
    %v164 = vpop.xlane.xlu0 %163
    %v165 = vsel %vm71, %v70, 0.0
    %166 = vadd.xlane.f32.xlu0 %v165
    %v167 = vpop.xlane.xlu0 %166
    %v168 = vmul.f32 %v74, 0.0625
    %v169 = vmul.f32 %v77, 0.0625
    %v170 = vmul.f32 %v80, 0.0625
    %v171 = vmul.f32 %v83, 0.0625
    %v172 = vmul.f32 %v86, 0.0625
    %v173 = vmul.f32 %v89, 0.0625
    %v174 = vmul.f32 %v92, 0.0625
    %v175 = vmul.f32 %v95, 0.0625
    %v176 = vmul.f32 %v98, 0.0625
    %v177 = vmul.f32 %v101, 0.0625
    %v178 = vmul.f32 %v104, 0.0625
    %v179 = vmul.f32 %v107, 0.0625
    %v180 = vmul.f32 %v110, 0.0625
    %v181 = vmul.f32 %v113, 0.0625
    %v182 = vmul.f32 %v116, 0.0625
    %v183 = vmul.f32 %v119, 0.0625
    %v184 = vmul.f32 %v122, 0.0625
    %v185 = vmul.f32 %v125, 0.0625
    %v186 = vmul.f32 %v128, 0.0625
    %v187 = vmul.f32 %v131, 0.0625
    %v188 = vmul.f32 %v134, 0.0625
    %v189 = vmul.f32 %v137, 0.0625
    %v190 = vmul.f32 %v140, 0.0625
    %v191 = vmul.f32 %v143, 0.0625
    %v192 = vmul.f32 %v146, 0.0625
    %v193 = vmul.f32 %v149, 0.0625
    %v194 = vmul.f32 %v152, 0.0625
    %v195 = vmul.f32 %v155, 0.0625
    %v196 = vmul.f32 %v158, 0.0625
    %v197 = vmul.f32 %v161, 0.0625
    %v198 = vmul.f32 %v164, 0.0625
    %v199 = vmul.f32 %v167, 0.0625
    %200 = vxpose.xlu0.b32.start [1/16] %v39, 128
    %201 = vxpose.xlu0.b32.cont [2/16] %v40, 128
    %202 = vxpose.xlu0.b32.cont [3/16] %v41, 128
    %203 = vxpose.xlu0.b32.cont [4/16] %v42, 128
    %204 = vxpose.xlu0.b32.cont [5/16] 0.0, 128
    %205 = vxpose.xlu0.b32.cont [6/16] 0.0, 128
    %206 = vxpose.xlu0.b32.cont [7/16] 0.0, 128
    %207 = vxpose.xlu0.b32.cont [8/16] 0.0, 128
    %208 = vxpose.xlu0.b32.cont [9/16] 0.0, 128
    %209 = vxpose.xlu0.b32.cont [10/16] 0.0, 128
    %210 = vxpose.xlu0.b32.cont [11/16] 0.0, 128
    %211 = vxpose.xlu0.b32.cont [12/16] 0.0, 128
    %212 = vxpose.xlu0.b32.cont [13/16] 0.0, 128
    %213 = vxpose.xlu0.b32.cont [14/16] 0.0, 128
    %214 = vxpose.xlu0.b32.cont [15/16] 0.0, 128
    %215 = vxpose.xlu0.b32.end [16/16] 0.0, 128
    %v216 = vpop.trf.xlu0
    %v217 = vpop.trf.xlu0
    %v218 = vpop.trf.xlu0
    %v219 = vpop.trf.xlu0
    %v220 = vpop.trf.xlu0
    %v221 = vpop.trf.xlu0
    %v222 = vpop.trf.xlu0
    %v223 = vpop.trf.xlu0
    %v224 = vpop.trf.xlu0
    %v225 = vpop.trf.xlu0
    %v226 = vpop.trf.xlu0
    %v227 = vpop.trf.xlu0
    %v228 = vpop.trf.xlu0
    %v229 = vpop.trf.xlu0
    %v230 = vpop.trf.xlu0
    %v231 = vpop.trf.xlu0
    %232 = vxpose.xlu0.b32.start [1/16] %v43, 128
    %233 = vxpose.xlu0.b32.cont [2/16] %v44, 128
    %234 = vxpose.xlu0.b32.cont [3/16] %v45, 128
    %235 = vxpose.xlu0.b32.cont [4/16] %v46, 128
    %236 = vxpose.xlu0.b32.cont [5/16] 0.0, 128
    %237 = vxpose.xlu0.b32.cont [6/16] 0.0, 128
    %238 = vxpose.xlu0.b32.cont [7/16] 0.0, 128
    %239 = vxpose.xlu0.b32.cont [8/16] 0.0, 128
    %240 = vxpose.xlu0.b32.cont [9/16] 0.0, 128
    %241 = vxpose.xlu0.b32.cont [10/16] 0.0, 128
    %242 = vxpose.xlu0.b32.cont [11/16] 0.0, 128
    %243 = vxpose.xlu0.b32.cont [12/16] 0.0, 128
    %244 = vxpose.xlu0.b32.cont [13/16] 0.0, 128
    %245 = vxpose.xlu0.b32.cont [14/16] 0.0, 128
    %246 = vxpose.xlu0.b32.cont [15/16] 0.0, 128
    %247 = vxpose.xlu0.b32.end [16/16] 0.0, 128
    %v248 = vpop.trf.xlu0
    %v249 = vpop.trf.xlu0
    %v250 = vpop.trf.xlu0
    %v251 = vpop.trf.xlu0
    %v252 = vpop.trf.xlu0
    %v253 = vpop.trf.xlu0
    %v254 = vpop.trf.xlu0
    %v255 = vpop.trf.xlu0
    %v256 = vpop.trf.xlu0
    %v257 = vpop.trf.xlu0
    %v258 = vpop.trf.xlu0
    %v259 = vpop.trf.xlu0
    %v260 = vpop.trf.xlu0
    %v261 = vpop.trf.xlu0
    %v262 = vpop.trf.xlu0
    %v263 = vpop.trf.xlu0
    %264 = vxpose.xlu0.b32.start [1/16] %v47, 128
    %265 = vxpose.xlu0.b32.cont [2/16] %v48, 128
    %266 = vxpose.xlu0.b32.cont [3/16] %v49, 128
    %267 = vxpose.xlu0.b32.cont [4/16] %v50, 128
    %268 = vxpose.xlu0.b32.cont [5/16] 0.0, 128
    %269 = vxpose.xlu0.b32.cont [6/16] 0.0, 128
    %270 = vxpose.xlu0.b32.cont [7/16] 0.0, 128
    %271 = vxpose.xlu0.b32.cont [8/16] 0.0, 128
    %272 = vxpose.xlu0.b32.cont [9/16] 0.0, 128
    %273 = vxpose.xlu0.b32.cont [10/16] 0.0, 128
    %274 = vxpose.xlu0.b32.cont [11/16] 0.0, 128
    %275 = vxpose.xlu0.b32.cont [12/16] 0.0, 128
    %276 = vxpose.xlu0.b32.cont [13/16] 0.0, 128
    %277 = vxpose.xlu0.b32.cont [14/16] 0.0, 128
    %278 = vxpose.xlu0.b32.cont [15/16] 0.0, 128
    %279 = vxpose.xlu0.b32.end [16/16] 0.0, 128
    %v280 = vpop.trf.xlu0
    %v281 = vpop.trf.xlu0
    %v282 = vpop.trf.xlu0
    %v283 = vpop.trf.xlu0
    %v284 = vpop.trf.xlu0
    %v285 = vpop.trf.xlu0
    %v286 = vpop.trf.xlu0
    %v287 = vpop.trf.xlu0
    %v288 = vpop.trf.xlu0
    %v289 = vpop.trf.xlu0
    %v290 = vpop.trf.xlu0
    %v291 = vpop.trf.xlu0
    %v292 = vpop.trf.xlu0
    %v293 = vpop.trf.xlu0
    %v294 = vpop.trf.xlu0
    %v295 = vpop.trf.xlu0
    %296 = vxpose.xlu0.b32.start [1/16] %v51, 128
    %297 = vxpose.xlu0.b32.cont [2/16] %v52, 128
    %298 = vxpose.xlu0.b32.cont [3/16] %v53, 128
    %299 = vxpose.xlu0.b32.cont [4/16] %v54, 128
    %300 = vxpose.xlu0.b32.cont [5/16] 0.0, 128
    %301 = vxpose.xlu0.b32.cont [6/16] 0.0, 128
    %302 = vxpose.xlu0.b32.cont [7/16] 0.0, 128
    %303 = vxpose.xlu0.b32.cont [8/16] 0.0, 128
    %304 = vxpose.xlu0.b32.cont [9/16] 0.0, 128
    %305 = vxpose.xlu0.b32.cont [10/16] 0.0, 128
    %306 = vxpose.xlu0.b32.cont [11/16] 0.0, 128
    %307 = vxpose.xlu0.b32.cont [12/16] 0.0, 128
    %308 = vxpose.xlu0.b32.cont [13/16] 0.0, 128
    %309 = vxpose.xlu0.b32.cont [14/16] 0.0, 128
    %310 = vxpose.xlu0.b32.cont [15/16] 0.0, 128
    %311 = vxpose.xlu0.b32.end [16/16] 0.0, 128
    %v312 = vpop.trf.xlu0
    %v313 = vpop.trf.xlu0
    %v314 = vpop.trf.xlu0
    %v315 = vpop.trf.xlu0
    %v316 = vpop.trf.xlu0
    %v317 = vpop.trf.xlu0
    %v318 = vpop.trf.xlu0
    %v319 = vpop.trf.xlu0
    %v320 = vpop.trf.xlu0
    %v321 = vpop.trf.xlu0
    %v322 = vpop.trf.xlu0
    %v323 = vpop.trf.xlu0
    %v324 = vpop.trf.xlu0
    %v325 = vpop.trf.xlu0
    %v326 = vpop.trf.xlu0
    %v327 = vpop.trf.xlu0
    %328 = vxpose.xlu0.b32.start [1/16] %v55, 128
    %329 = vxpose.xlu0.b32.cont [2/16] %v56, 128
    %330 = vxpose.xlu0.b32.cont [3/16] %v57, 128
    %331 = vxpose.xlu0.b32.cont [4/16] %v58, 128
    %332 = vxpose.xlu0.b32.cont [5/16] 0.0, 128
    %333 = vxpose.xlu0.b32.cont [6/16] 0.0, 128
    %334 = vxpose.xlu0.b32.cont [7/16] 0.0, 128
    %335 = vxpose.xlu0.b32.cont [8/16] 0.0, 128
    %336 = vxpose.xlu0.b32.cont [9/16] 0.0, 128
    %337 = vxpose.xlu0.b32.cont [10/16] 0.0, 128
    %338 = vxpose.xlu0.b32.cont [11/16] 0.0, 128
    %339 = vxpose.xlu0.b32.cont [12/16] 0.0, 128
    %340 = vxpose.xlu0.b32.cont [13/16] 0.0, 128
    %341 = vxpose.xlu0.b32.cont [14/16] 0.0, 128
    %342 = vxpose.xlu0.b32.cont [15/16] 0.0, 128
    %343 = vxpose.xlu0.b32.end [16/16] 0.0, 128
    %v344 = vpop.trf.xlu0
    %v345 = vpop.trf.xlu0
    %v346 = vpop.trf.xlu0
    %v347 = vpop.trf.xlu0
    %v348 = vpop.trf.xlu0
    %v349 = vpop.trf.xlu0
    %v350 = vpop.trf.xlu0
    %v351 = vpop.trf.xlu0
    %v352 = vpop.trf.xlu0
    %v353 = vpop.trf.xlu0
    %v354 = vpop.trf.xlu0
    %v355 = vpop.trf.xlu0
    %v356 = vpop.trf.xlu0
    %v357 = vpop.trf.xlu0
    %v358 = vpop.trf.xlu0
    %v359 = vpop.trf.xlu0
    %360 = vxpose.xlu0.b32.start [1/16] %v59, 128
    %361 = vxpose.xlu0.b32.cont [2/16] %v60, 128
    %362 = vxpose.xlu0.b32.cont [3/16] %v61, 128
    %363 = vxpose.xlu0.b32.cont [4/16] %v62, 128
    %364 = vxpose.xlu0.b32.cont [5/16] 0.0, 128
    %365 = vxpose.xlu0.b32.cont [6/16] 0.0, 128
    %366 = vxpose.xlu0.b32.cont [7/16] 0.0, 128
    %367 = vxpose.xlu0.b32.cont [8/16] 0.0, 128
    %368 = vxpose.xlu0.b32.cont [9/16] 0.0, 128
    %369 = vxpose.xlu0.b32.cont [10/16] 0.0, 128
    %370 = vxpose.xlu0.b32.cont [11/16] 0.0, 128
    %371 = vxpose.xlu0.b32.cont [12/16] 0.0, 128
    %372 = vxpose.xlu0.b32.cont [13/16] 0.0, 128
    %373 = vxpose.xlu0.b32.cont [14/16] 0.0, 128
    %374 = vxpose.xlu0.b32.cont [15/16] 0.0, 128
    %375 = vxpose.xlu0.b32.end [16/16] 0.0, 128
    %v376 = vpop.trf.xlu0
    %v377 = vpop.trf.xlu0
    %v378 = vpop.trf.xlu0
    %v379 = vpop.trf.xlu0
    %v380 = vpop.trf.xlu0
    %v381 = vpop.trf.xlu0
    %v382 = vpop.trf.xlu0
    %v383 = vpop.trf.xlu0
    %v384 = vpop.trf.xlu0
    %v385 = vpop.trf.xlu0
    %v386 = vpop.trf.xlu0
    %v387 = vpop.trf.xlu0
    %v388 = vpop.trf.xlu0
    %v389 = vpop.trf.xlu0
    %v390 = vpop.trf.xlu0
    %v391 = vpop.trf.xlu0
    %392 = vxpose.xlu0.b32.start [1/16] %v63, 128
    %393 = vxpose.xlu0.b32.cont [2/16] %v64, 128
    %394 = vxpose.xlu0.b32.cont [3/16] %v65, 128
    %395 = vxpose.xlu0.b32.cont [4/16] %v66, 128
    %396 = vxpose.xlu0.b32.cont [5/16] 0.0, 128
    %397 = vxpose.xlu0.b32.cont [6/16] 0.0, 128
    %398 = vxpose.xlu0.b32.cont [7/16] 0.0, 128
    %399 = vxpose.xlu0.b32.cont [8/16] 0.0, 128
    %400 = vxpose.xlu0.b32.cont [9/16] 0.0, 128
    %401 = vxpose.xlu0.b32.cont [10/16] 0.0, 128
    %402 = vxpose.xlu0.b32.cont [11/16] 0.0, 128
    %403 = vxpose.xlu0.b32.cont [12/16] 0.0, 128
    %404 = vxpose.xlu0.b32.cont [13/16] 0.0, 128
    %405 = vxpose.xlu0.b32.cont [14/16] 0.0, 128
    %406 = vxpose.xlu0.b32.cont [15/16] 0.0, 128
    %407 = vxpose.xlu0.b32.end [16/16] 0.0, 128
    %v408 = vpop.trf.xlu0
    %v409 = vpop.trf.xlu0
    %v410 = vpop.trf.xlu0
    %v411 = vpop.trf.xlu0
    %v412 = vpop.trf.xlu0
    %v413 = vpop.trf.xlu0
    %v414 = vpop.trf.xlu0
    %v415 = vpop.trf.xlu0
    %v416 = vpop.trf.xlu0
    %v417 = vpop.trf.xlu0
    %v418 = vpop.trf.xlu0
    %v419 = vpop.trf.xlu0
    %v420 = vpop.trf.xlu0
    %v421 = vpop.trf.xlu0
    %v422 = vpop.trf.xlu0
    %v423 = vpop.trf.xlu0
    %424 = vxpose.xlu0.b32.start [1/16] %v67, 128
    %425 = vxpose.xlu0.b32.cont [2/16] %v68, 128
    %426 = vxpose.xlu0.b32.cont [3/16] %v69, 128
    %427 = vxpose.xlu0.b32.cont [4/16] %v70, 128
    %428 = vxpose.xlu0.b32.cont [5/16] 0.0, 128
    %429 = vxpose.xlu0.b32.cont [6/16] 0.0, 128
    %430 = vxpose.xlu0.b32.cont [7/16] 0.0, 128
    %431 = vxpose.xlu0.b32.cont [8/16] 0.0, 128
    %432 = vxpose.xlu0.b32.cont [9/16] 0.0, 128
    %433 = vxpose.xlu0.b32.cont [10/16] 0.0, 128
    %434 = vxpose.xlu0.b32.cont [11/16] 0.0, 128
    %435 = vxpose.xlu0.b32.cont [12/16] 0.0, 128
    %436 = vxpose.xlu0.b32.cont [13/16] 0.0, 128
    %437 = vxpose.xlu0.b32.cont [14/16] 0.0, 128
    %438 = vxpose.xlu0.b32.cont [15/16] 0.0, 128
    %439 = vxpose.xlu0.b32.end [16/16] 0.0, 128
    %v440 = vpop.trf.xlu0
    %v441 = vpop.trf.xlu0
    %v442 = vpop.trf.xlu0
    %v443 = vpop.trf.xlu0
    %v444 = vpop.trf.xlu0
    %v445 = vpop.trf.xlu0
    %v446 = vpop.trf.xlu0
    %v447 = vpop.trf.xlu0
    %v448 = vpop.trf.xlu0
    %v449 = vpop.trf.xlu0
    %v450 = vpop.trf.xlu0
    %v451 = vpop.trf.xlu0
    %v452 = vpop.trf.xlu0
    %v453 = vpop.trf.xlu0
    %v454 = vpop.trf.xlu0
    %v455 = vpop.trf.xlu0
    %v456 = vld [vmem:[%s1] sm:$0xff]
    %v457 = vld [vmem:[%s1 + $0x8] sm:$0xff]
    %v458 = vld [vmem:[%s1 + $0x10] sm:$0x1]
    %v459 = vld [vmem:[%s2] sm:$0xff]
    %v460 = vld [vmem:[%s2 + $0x8] sm:$0xff]
    %v461 = vld [vmem:[%s2 + $0x10] sm:$0x1]
    %v462 = vld [vmem:[%s3] sm:$0xff]
    %v463 = vld [vmem:[%s3 + $0x8] sm:$0xff]
    %v464 = vld [vmem:[%s3 + $0x10] sm:$0xff]
    %v465 = vld [vmem:[%s3 + $0x18] sm:$0xff]
    %v466 = vld [vmem:[%s4] sm:$0x1]
    %v468 = vlaneseq
    %v469 = vshrl.u32 %v468, 7
    %v470 = vsub.s32 0, %v469
    %v471 = vrot.slane %v466, %v470
    %v505 = vlaneseq
    %v506 = vand.u32 %v505, 127
    %v507 = vlaneseq
    %v508 = vshrl.u32 %v507, 7
    %v509 = vsub.s32 %v506, %v508
    %v510 = vrot.slane %v168, %v509
    %v511 = vadd.s32 %v506, 4294967288
    %v512 = vlaneseq
    %v513 = vshrl.u32 %v512, 7
    %v514 = vsub.s32 %v511, %v513
    %v515 = vrot.slane %v169, %v514
    %vm516 = vcmask 130112
    %v517 = vsel %vm516, %v515, %v510
    %v518 = vadd.s32 %v506, 4294967280
    %v519 = vlaneseq
    %v520 = vshrl.u32 %v519, 7
    %v521 = vsub.s32 %v518, %v520
    %v522 = vrot.slane %v170, %v521
    %vm523 = vcmask 195712
    %v524 = vsel %vm523, %v522, %v517
    %v525 = vadd.s32 %v506, 4294967272
    %v526 = vlaneseq
    %v527 = vshrl.u32 %v526, 7
    %v528 = vsub.s32 %v525, %v527
    %v529 = vrot.slane %v171, %v528
    %vm530 = vcmask 261312
    %v531 = vsel %vm530, %v529, %v524
    %v532 = vlaneseq
    %v533 = vshrl.u32 %v532, 7
    %v534 = vsub.s32 %v506, %v533
    %v535 = vrot.slane %v172, %v534
    %v536 = vlaneseq
    %v537 = vshrl.u32 %v536, 7
    %v538 = vsub.s32 %v511, %v537
    %v539 = vrot.slane %v173, %v538
    %v540 = vsel %vm516, %v539, %v535
    %v541 = vlaneseq
    %v542 = vshrl.u32 %v541, 7
    %v543 = vsub.s32 %v518, %v542
    %v544 = vrot.slane %v174, %v543
    %v545 = vsel %vm523, %v544, %v540
    %v546 = vlaneseq
    %v547 = vshrl.u32 %v546, 7
    %v548 = vsub.s32 %v525, %v547
    %v549 = vrot.slane %v175, %v548
    %v550 = vsel %vm530, %v549, %v545
    %v551 = vlaneseq
    %v552 = vshrl.u32 %v551, 7
    %v553 = vsub.s32 %v506, %v552
    %v554 = vrot.slane %v176, %v553
    %v555 = vlaneseq
    %v556 = vshrl.u32 %v555, 7
    %v557 = vsub.s32 %v511, %v556
    %v558 = vrot.slane %v177, %v557
    %v559 = vsel %vm516, %v558, %v554
    %v560 = vlaneseq
    %v561 = vshrl.u32 %v560, 7
    %v562 = vsub.s32 %v518, %v561
    %v563 = vrot.slane %v178, %v562
    %v564 = vsel %vm523, %v563, %v559
    %v565 = vlaneseq
    %v566 = vshrl.u32 %v565, 7
    %v567 = vsub.s32 %v525, %v566
    %v568 = vrot.slane %v179, %v567
    %v569 = vsel %vm530, %v568, %v564
    %v570 = vlaneseq
    %v571 = vshrl.u32 %v570, 7
    %v572 = vsub.s32 %v506, %v571
    %v573 = vrot.slane %v180, %v572
    %v574 = vlaneseq
    %v575 = vshrl.u32 %v574, 7
    %v576 = vsub.s32 %v511, %v575
    %v577 = vrot.slane %v181, %v576
    %v578 = vsel %vm516, %v577, %v573
    %v579 = vlaneseq
    %v580 = vshrl.u32 %v579, 7
    %v581 = vsub.s32 %v518, %v580
    %v582 = vrot.slane %v182, %v581
    %v583 = vsel %vm523, %v582, %v578
    %v584 = vlaneseq
    %v585 = vshrl.u32 %v584, 7
    %v586 = vsub.s32 %v525, %v585
    %v587 = vrot.slane %v183, %v586
    %v588 = vsel %vm530, %v587, %v583
    %v589 = vlaneseq
    %v590 = vshrl.u32 %v589, 7
    %v591 = vsub.s32 %v506, %v590
    %v592 = vrot.slane %v184, %v591
    %v593 = vlaneseq
    %v594 = vshrl.u32 %v593, 7
    %v595 = vsub.s32 %v511, %v594
    %v596 = vrot.slane %v185, %v595
    %v597 = vsel %vm516, %v596, %v592
    %v598 = vlaneseq
    %v599 = vshrl.u32 %v598, 7
    %v600 = vsub.s32 %v518, %v599
    %v601 = vrot.slane %v186, %v600
    %v602 = vsel %vm523, %v601, %v597
    %v603 = vlaneseq
    %v604 = vshrl.u32 %v603, 7
    %v605 = vsub.s32 %v525, %v604
    %v606 = vrot.slane %v187, %v605
    %v607 = vsel %vm530, %v606, %v602
    %v608 = vlaneseq
    %v609 = vshrl.u32 %v608, 7
    %v610 = vsub.s32 %v506, %v609
    %v611 = vrot.slane %v188, %v610
    %v612 = vlaneseq
    %v613 = vshrl.u32 %v612, 7
    %v614 = vsub.s32 %v511, %v613
    %v615 = vrot.slane %v189, %v614
    %v616 = vsel %vm516, %v615, %v611
    %v617 = vlaneseq
    %v618 = vshrl.u32 %v617, 7
    %v619 = vsub.s32 %v518, %v618
    %v620 = vrot.slane %v190, %v619
    %v621 = vsel %vm523, %v620, %v616
    %v622 = vlaneseq
    %v623 = vshrl.u32 %v622, 7
    %v624 = vsub.s32 %v525, %v623
    %v625 = vrot.slane %v191, %v624
    %v626 = vsel %vm530, %v625, %v621
    %v627 = vlaneseq
    %v628 = vshrl.u32 %v627, 7
    %v629 = vsub.s32 %v506, %v628
    %v630 = vrot.slane %v192, %v629
    %v631 = vlaneseq
    %v632 = vshrl.u32 %v631, 7
    %v633 = vsub.s32 %v511, %v632
    %v634 = vrot.slane %v193, %v633
    %v635 = vsel %vm516, %v634, %v630
    %v636 = vlaneseq
    %v637 = vshrl.u32 %v636, 7
    %v638 = vsub.s32 %v518, %v637
    %v639 = vrot.slane %v194, %v638
    %v640 = vsel %vm523, %v639, %v635
    %v641 = vlaneseq
    %v642 = vshrl.u32 %v641, 7
    %v643 = vsub.s32 %v525, %v642
    %v644 = vrot.slane %v195, %v643
    %v645 = vsel %vm530, %v644, %v640
    %v646 = vlaneseq
    %v647 = vshrl.u32 %v646, 7
    %v648 = vsub.s32 %v506, %v647
    %v649 = vrot.slane %v196, %v648
    %v650 = vlaneseq
    %v651 = vshrl.u32 %v650, 7
    %v652 = vsub.s32 %v511, %v651
    %v653 = vrot.slane %v197, %v652
    %v654 = vsel %vm516, %v653, %v649
    %v655 = vlaneseq
    %v656 = vshrl.u32 %v655, 7
    %v657 = vsub.s32 %v518, %v656
    %v658 = vrot.slane %v198, %v657
    %v659 = vsel %vm523, %v658, %v654
    %v660 = vlaneseq
    %v661 = vshrl.u32 %v660, 7
    %v662 = vsub.s32 %v525, %v661
    %v663 = vrot.slane %v199, %v662
    %v664 = vsel %vm530, %v663, %v659
    %vm665 = vcmask 1041409
    %v666 = vsel %vm665, %v550, %v531
    %vm667 = vcmask 1042434
    %v668 = vsel %vm667, %v569, %v666
    %vm669 = vcmask 1043459
    %v670 = vsel %vm669, %v588, %v668
    %vm671 = vcmask 1044484
    %v672 = vsel %vm671, %v607, %v670
    %vm673 = vcmask 1045509
    %v674 = vsel %vm673, %v626, %v672
    %vm675 = vcmask 1046534
    %v676 = vsel %vm675, %v645, %v674
    %vm677 = vcmask 1047559
    %v678 = vsel %vm677, %v664, %v676
    %vm679 = vcmask 261120
    %v680 = vsel %vm679, %v678, 0
    %682 = vmatprep.subr.mxu0 0.0
    %683 = vmatpush1.msra.mxu0 %v462
    %684 = vmatprep.subr.mxu0 0.0
    %685 = vmatpush1.msra.mxu0 %v463
    %686 = vmatprep.subr.mxu0 0.0
    %687 = vmatpush1.msra.mxu0 %v464
    %688 = vmatprep.subr.mxu0 0.0
    %689 = vmatpush1.msra.mxu0 %v465
    %690 = vmatprep.subr.mxu0 0.0
    %691 = vmatpush1.msra.mxu0 0.0
    %692 = vmatprep.subr.mxu0 0.0
    %693 = vmatpush1.msra.mxu0 0.0
    %694 = vmatprep.subr.mxu0 0.0
    %695 = vmatpush1.msra.mxu0 0.0
    %696 = vmatprep.subr.mxu0 0.0
    %697 = vmatpush1.msra.mxu0 0.0
    %698 = vmatprep.subr.mxu0 0.0
    %699 = vmatpush1.msra.mxu0 0.0
    %700 = vmatprep.subr.mxu0 0.0
    %701 = vmatpush1.msra.mxu0 0.0
    %702 = vmatprep.subr.mxu0 0.0
    %703 = vmatpush1.msra.mxu0 0.0
    %704 = vmatprep.subr.mxu0 0.0
    %705 = vmatpush1.msra.mxu0 0.0
    %706 = vmatprep.subr.mxu0 0.0
    %707 = vmatpush1.msra.mxu0 0.0
    %708 = vmatprep.subr.mxu0 0.0
    %709 = vmatpush1.msra.mxu0 0.0
    %710 = vmatprep.subr.mxu0 0.0
    %711 = vmatpush1.msra.mxu0 0.0
    %712 = vmatprep.subr.mxu0 0.0
    %713 = vmatpush1.msra.mxu0 0.0
    %714 = vmatprep.subr.mxu0 0.0
    %715 = vmatpush1.msra.mxu0 0.0
    %716 = vmatprep.subr.mxu0 0.0
    %717 = vmatpush1.msra.mxu0 0.0
    %718 = vmatprep.subr.mxu0 0.0
    %719 = vmatpush1.msra.mxu0 0.0
    %720 = vmatprep.subr.mxu0 0.0
    %721 = vmatpush1.msra.mxu0 0.0
    %722 = vmatprep.subr.mxu0 0.0
    %723 = vmatpush1.msra.mxu0 0.0
    %724 = vmatprep.subr.mxu0 0.0
    %725 = vmatpush1.msra.mxu0 0.0
    %726 = vmatprep.subr.mxu0 0.0
    %727 = vmatpush1.msra.mxu0 0.0
    %728 = vmatprep.subr.mxu0 0.0
    %729 = vmatpush1.msra.mxu0 0.0
    %730 = vmatprep.subr.mxu0 0.0
    %731 = vmatpush1.msra.mxu0 0.0
    %732 = vmatprep.subr.mxu0 0.0
    %733 = vmatpush1.msra.mxu0 0.0
    %734 = vmatprep.subr.mxu0 0.0
    %735 = vmatpush1.msra.mxu0 0.0
    %736 = vmatprep.subr.mxu0 0.0
    %737 = vmatpush1.msra.mxu0 0.0
    %738 = vmatprep.subr.mxu0 0.0
    %739 = vmatpush1.msra.mxu0 0.0
    %740 = vmatprep.subr.mxu0 0.0
    %741 = vmatpush1.msra.mxu0 0.0
    %742 = vmatprep.subr.mxu0 0.0
    %743 = vmatpush1.msra.mxu0 0.0
    %744 = vmatprep.subr.mxu0 0.0
    %745 = vmatpush1.msra.mxu0 0.0
    %746 = vmatprep.mubr.f32.mxu0 0.0
    %747 = vmatmul.mubr.f32.gmra.mrb[0].mxu0 %v680
    %v748 = vpop.f32.mrb[0].mxu0
    %v749 = vadd.f32 %v471, %v748
    %v750 = vpop.f32.mrb[0].mxu0
    %751 = vdwg.mxu0
    %v752 = vld [vmem:[%s5] sm:$0xff]
    %v753 = vld [vmem:[%s5 + $0x8] sm:$0xff]
    %v754 = vld [vmem:[%s5 + $0x10] sm:$0xff]
    %v755 = vld [vmem:[%s5 + $0x18] sm:$0xff]
    %v756 = vlaneseq
    %v757 = vshrl.u32 %v756, 7
    %v758 = vsub.s32 0, %v757
    %v759 = vrot.slane %v456, %v758
    %760 = vmatprep.subr.mxu0 0.0
    %761 = vmatpush1.msra.mxu0 %v752
    %762 = vmatprep.subr.mxu0 0.0
    %763 = vmatpush1.msra.mxu0 %v753
    %764 = vmatprep.subr.mxu0 0.0
    %765 = vmatpush1.msra.mxu0 %v754
    %766 = vmatprep.subr.mxu0 0.0
    %767 = vmatpush1.msra.mxu0 %v755
    %768 = vmatprep.subr.mxu0 0.0
    %769 = vmatpush1.msra.mxu0 0.0
    %770 = vmatprep.subr.mxu0 0.0
    %771 = vmatpush1.msra.mxu0 0.0
    %772 = vmatprep.subr.mxu0 0.0
    %773 = vmatpush1.msra.mxu0 0.0
    %774 = vmatprep.subr.mxu0 0.0
    %775 = vmatpush1.msra.mxu0 0.0
    %776 = vmatprep.subr.mxu0 0.0
    %777 = vmatpush1.msra.mxu0 0.0
    %778 = vmatprep.subr.mxu0 0.0
    %779 = vmatpush1.msra.mxu0 0.0
    %780 = vmatprep.subr.mxu0 0.0
    %781 = vmatpush1.msra.mxu0 0.0
    %782 = vmatprep.subr.mxu0 0.0
    %783 = vmatpush1.msra.mxu0 0.0
    %784 = vmatprep.subr.mxu0 0.0
    %785 = vmatpush1.msra.mxu0 0.0
    %786 = vmatprep.subr.mxu0 0.0
    %787 = vmatpush1.msra.mxu0 0.0
    %788 = vmatprep.subr.mxu0 0.0
    %789 = vmatpush1.msra.mxu0 0.0
    %790 = vmatprep.subr.mxu0 0.0
    %791 = vmatpush1.msra.mxu0 0.0
    %792 = vmatprep.subr.mxu0 0.0
    %793 = vmatpush1.msra.mxu0 0.0
    %794 = vmatprep.subr.mxu0 0.0
    %795 = vmatpush1.msra.mxu0 0.0
    %796 = vmatprep.subr.mxu0 0.0
    %797 = vmatpush1.msra.mxu0 0.0
    %798 = vmatprep.subr.mxu0 0.0
    %799 = vmatpush1.msra.mxu0 0.0
    %800 = vmatprep.subr.mxu0 0.0
    %801 = vmatpush1.msra.mxu0 0.0
    %802 = vmatprep.subr.mxu0 0.0
    %803 = vmatpush1.msra.mxu0 0.0
    %804 = vmatprep.subr.mxu0 0.0
    %805 = vmatpush1.msra.mxu0 0.0
    %806 = vmatprep.subr.mxu0 0.0
    %807 = vmatpush1.msra.mxu0 0.0
    %808 = vmatprep.subr.mxu0 0.0
    %809 = vmatpush1.msra.mxu0 0.0
    %810 = vmatprep.subr.mxu0 0.0
    %811 = vmatpush1.msra.mxu0 0.0
    %812 = vmatprep.subr.mxu0 0.0
    %813 = vmatpush1.msra.mxu0 0.0
    %814 = vmatprep.subr.mxu0 0.0
    %815 = vmatpush1.msra.mxu0 0.0
    %816 = vmatprep.subr.mxu0 0.0
    %817 = vmatpush1.msra.mxu0 0.0
    %818 = vmatprep.subr.mxu0 0.0
    %819 = vmatpush1.msra.mxu0 0.0
    %820 = vmatprep.subr.mxu0 0.0
    %821 = vmatpush1.msra.mxu0 0.0
    %822 = vmatprep.subr.mxu0 0.0
    %823 = vmatpush1.msra.mxu0 0.0
    %824 = vmatprep.mubr.f32.mxu0 0.0
    %825 = vmatmul.mubr.f32.gmra.mrb[0].mxu0 %v680
    %v826 = vpop.f32.mrb[0].mxu0
    %v827 = vadd.f32 %v759, %v826
    %v828 = vpop.f32.mrb[0].mxu0
    %829 = vdwg.mxu0
    %v830 = vld [vmem:[%s6] sm:$0xff]
    %v831 = vld [vmem:[%s6 + $0x8] sm:$0xff]
    %v832 = vld [vmem:[%s6 + $0x10] sm:$0xff]
    %v833 = vld [vmem:[%s6 + $0x18] sm:$0xff]
    %v834 = vlaneseq
    %v835 = vshrl.u32 %v834, 7
    %v836 = vsub.s32 0, %v835
    %v837 = vrot.slane %v459, %v836
    %838 = vmatprep.subr.mxu0 0.0
    %839 = vmatpush1.msra.mxu0 %v830
    %840 = vmatprep.subr.mxu0 0.0
    %841 = vmatpush1.msra.mxu0 %v831
    %842 = vmatprep.subr.mxu0 0.0
    %843 = vmatpush1.msra.mxu0 %v832
    %844 = vmatprep.subr.mxu0 0.0
    %845 = vmatpush1.msra.mxu0 %v833
    %846 = vmatprep.subr.mxu0 0.0
    %847 = vmatpush1.msra.mxu0 0.0
    %848 = vmatprep.subr.mxu0 0.0
    %849 = vmatpush1.msra.mxu0 0.0
    %850 = vmatprep.subr.mxu0 0.0
    %851 = vmatpush1.msra.mxu0 0.0
    %852 = vmatprep.subr.mxu0 0.0
    %853 = vmatpush1.msra.mxu0 0.0
    %854 = vmatprep.subr.mxu0 0.0
    %855 = vmatpush1.msra.mxu0 0.0
    %856 = vmatprep.subr.mxu0 0.0
    %857 = vmatpush1.msra.mxu0 0.0
    %858 = vmatprep.subr.mxu0 0.0
    %859 = vmatpush1.msra.mxu0 0.0
    %860 = vmatprep.subr.mxu0 0.0
    %861 = vmatpush1.msra.mxu0 0.0
    %862 = vmatprep.subr.mxu0 0.0
    %863 = vmatpush1.msra.mxu0 0.0
    %864 = vmatprep.subr.mxu0 0.0
    %865 = vmatpush1.msra.mxu0 0.0
    %866 = vmatprep.subr.mxu0 0.0
    %867 = vmatpush1.msra.mxu0 0.0
    %868 = vmatprep.subr.mxu0 0.0
    %869 = vmatpush1.msra.mxu0 0.0
    %870 = vmatprep.subr.mxu0 0.0
    %871 = vmatpush1.msra.mxu0 0.0
    %872 = vmatprep.subr.mxu0 0.0
    %873 = vmatpush1.msra.mxu0 0.0
    %874 = vmatprep.subr.mxu0 0.0
    %875 = vmatpush1.msra.mxu0 0.0
    %876 = vmatprep.subr.mxu0 0.0
    %877 = vmatpush1.msra.mxu0 0.0
    %878 = vmatprep.subr.mxu0 0.0
    %879 = vmatpush1.msra.mxu0 0.0
    %880 = vmatprep.subr.mxu0 0.0
    %881 = vmatpush1.msra.mxu0 0.0
    %882 = vmatprep.subr.mxu0 0.0
    %883 = vmatpush1.msra.mxu0 0.0
    %884 = vmatprep.subr.mxu0 0.0
    %885 = vmatpush1.msra.mxu0 0.0
    %886 = vmatprep.subr.mxu0 0.0
    %887 = vmatpush1.msra.mxu0 0.0
    %888 = vmatprep.subr.mxu0 0.0
    %889 = vmatpush1.msra.mxu0 0.0
    %890 = vmatprep.subr.mxu0 0.0
    %891 = vmatpush1.msra.mxu0 0.0
    %892 = vmatprep.subr.mxu0 0.0
    %893 = vmatpush1.msra.mxu0 0.0
    %894 = vmatprep.subr.mxu0 0.0
    %895 = vmatpush1.msra.mxu0 0.0
    %896 = vmatprep.subr.mxu0 0.0
    %897 = vmatpush1.msra.mxu0 0.0
    %898 = vmatprep.subr.mxu0 0.0
    %899 = vmatpush1.msra.mxu0 0.0
    %900 = vmatprep.subr.mxu0 0.0
    %901 = vmatpush1.msra.mxu0 0.0
    %902 = vmatprep.mubr.f32.mxu0 0.0
    %903 = vmatmul.mubr.f32.gmra.mrb[0].mxu0 %v680
    %v904 = vpop.f32.mrb[0].mxu0
    %v905 = vadd.f32 %v837, %v904
    %v906 = vpop.f32.mrb[0].mxu0
    %907 = vdwg.mxu0
    %v909 = vsel %vm679, %v216, 0
    %v912 = vsel %vm679, %v217, 0
    %v915 = vsel %vm679, %v248, 0
    %v918 = vsel %vm679, %v249, 0
    %v921 = vsel %vm679, %v280, 0
    %v924 = vsel %vm679, %v281, 0
    %v927 = vsel %vm679, %v312, 0
    %v930 = vsel %vm679, %v313, 0
    %v933 = vsel %vm679, %v344, 0
    %v936 = vsel %vm679, %v345, 0
    %v939 = vsel %vm679, %v376, 0
    %v942 = vsel %vm679, %v377, 0
    %v945 = vsel %vm679, %v408, 0
    %v948 = vsel %vm679, %v409, 0
    %v951 = vsel %vm679, %v440, 0
    %v954 = vsel %vm679, %v441, 0
    %956 = vmatprep.subr.mxu0 0.0
    %957 = vmatpush1.msra.mxu0 %v752
    %958 = vmatprep.subr.mxu0 0.0
    %959 = vmatpush1.msra.mxu0 %v753
    %960 = vmatprep.subr.mxu0 0.0
    %961 = vmatpush1.msra.mxu0 %v754
    %962 = vmatprep.subr.mxu0 0.0
    %963 = vmatpush1.msra.mxu0 %v755
    %964 = vmatprep.subr.mxu0 0.0
    %965 = vmatpush1.msra.mxu0 0.0
    %966 = vmatprep.subr.mxu0 0.0
    %967 = vmatpush1.msra.mxu0 0.0
    %968 = vmatprep.subr.mxu0 0.0
    %969 = vmatpush1.msra.mxu0 0.0
    %970 = vmatprep.subr.mxu0 0.0
    %971 = vmatpush1.msra.mxu0 0.0
    %972 = vmatprep.subr.mxu0 0.0
    %973 = vmatpush1.msra.mxu0 0.0
    %974 = vmatprep.subr.mxu0 0.0
    %975 = vmatpush1.msra.mxu0 0.0
    %976 = vmatprep.subr.mxu0 0.0
    %977 = vmatpush1.msra.mxu0 0.0
    %978 = vmatprep.subr.mxu0 0.0
    %979 = vmatpush1.msra.mxu0 0.0
    %980 = vmatprep.subr.mxu0 0.0
    %981 = vmatpush1.msra.mxu0 0.0
    %982 = vmatprep.subr.mxu0 0.0
    %983 = vmatpush1.msra.mxu0 0.0
    %984 = vmatprep.subr.mxu0 0.0
    %985 = vmatpush1.msra.mxu0 0.0
    %986 = vmatprep.subr.mxu0 0.0
    %987 = vmatpush1.msra.mxu0 0.0
    %988 = vmatprep.subr.mxu0 0.0
    %989 = vmatpush1.msra.mxu0 0.0
    %990 = vmatprep.subr.mxu0 0.0
    %991 = vmatpush1.msra.mxu0 0.0
    %992 = vmatprep.subr.mxu0 0.0
    %993 = vmatpush1.msra.mxu0 0.0
    %994 = vmatprep.subr.mxu0 0.0
    %995 = vmatpush1.msra.mxu0 0.0
    %996 = vmatprep.subr.mxu0 0.0
    %997 = vmatpush1.msra.mxu0 0.0
    %998 = vmatprep.subr.mxu0 0.0
    %999 = vmatpush1.msra.mxu0 0.0
    %1000 = vmatprep.subr.mxu0 0.0
    %1001 = vmatpush1.msra.mxu0 0.0
    %1002 = vmatprep.subr.mxu0 0.0
    %1003 = vmatpush1.msra.mxu0 0.0
    %1004 = vmatprep.subr.mxu0 0.0
    %1005 = vmatpush1.msra.mxu0 0.0
    %1006 = vmatprep.subr.mxu0 0.0
    %1007 = vmatpush1.msra.mxu0 0.0
    %1008 = vmatprep.subr.mxu0 0.0
    %1009 = vmatpush1.msra.mxu0 0.0
    %1010 = vmatprep.subr.mxu0 0.0
    %1011 = vmatpush1.msra.mxu0 0.0
    %1012 = vmatprep.subr.mxu0 0.0
    %1013 = vmatpush1.msra.mxu0 0.0
    %1014 = vmatprep.subr.mxu0 0.0
    %1015 = vmatpush1.msra.mxu0 0.0
    %1016 = vmatprep.subr.mxu0 0.0
    %1017 = vmatpush1.msra.mxu0 0.0
    %1018 = vmatprep.subr.mxu0 0.0
    %1019 = vmatpush1.msra.mxu0 0.0
    %1020 = vmatprep.mubr.f32.mxu0 0.0
    %1021 = vmatmul.mubr.f32.gmra.mrb[0].mxu0 %v909
    %v1022 = vpop.f32.mrb[0].mxu0
    %v1023 = vadd.f32 0.0, %v1022
    %v1024 = vpop.f32.mrb[0].mxu0
    %1025 = vmatprep.mubr.f32.mxu0 0.0
    %1026 = vmatmul.mubr.f32.gmra.mrb[0].mxu0 %v912
    %v1027 = vpop.f32.mrb[0].mxu0
    %v1028 = vadd.f32 0.0, %v1027
    %v1029 = vpop.f32.mrb[0].mxu0
    %1030 = vmatprep.mubr.f32.mxu0 0.0
    %1031 = vmatmul.mubr.f32.gmra.mrb[0].mxu0 %v915
    %v1032 = vpop.f32.mrb[0].mxu0
    %v1033 = vadd.f32 0.0, %v1032
    %v1034 = vpop.f32.mrb[0].mxu0
    %1035 = vmatprep.mubr.f32.mxu0 0.0
    %1036 = vmatmul.mubr.f32.gmra.mrb[0].mxu0 %v918
    %v1037 = vpop.f32.mrb[0].mxu0
    %v1038 = vadd.f32 0.0, %v1037
    %v1039 = vpop.f32.mrb[0].mxu0
    %1040 = vmatprep.mubr.f32.mxu0 0.0
    %1041 = vmatmul.mubr.f32.gmra.mrb[0].mxu0 %v921
    %v1042 = vpop.f32.mrb[0].mxu0
    %v1043 = vadd.f32 0.0, %v1042
    %v1044 = vpop.f32.mrb[0].mxu0
    %1045 = vmatprep.mubr.f32.mxu0 0.0
    %1046 = vmatmul.mubr.f32.gmra.mrb[0].mxu0 %v924
    %v1047 = vpop.f32.mrb[0].mxu0
    %v1048 = vadd.f32 0.0, %v1047
    %v1049 = vpop.f32.mrb[0].mxu0
    %1050 = vmatprep.mubr.f32.mxu0 0.0
    %1051 = vmatmul.mubr.f32.gmra.mrb[0].mxu0 %v927
    %v1052 = vpop.f32.mrb[0].mxu0
    %v1053 = vadd.f32 0.0, %v1052
    %v1054 = vpop.f32.mrb[0].mxu0
    %1055 = vmatprep.mubr.f32.mxu0 0.0
    %1056 = vmatmul.mubr.f32.gmra.mrb[0].mxu0 %v930
    %v1057 = vpop.f32.mrb[0].mxu0
    %v1058 = vadd.f32 0.0, %v1057
    %v1059 = vpop.f32.mrb[0].mxu0
    %1060 = vmatprep.mubr.f32.mxu0 0.0
    %1061 = vmatmul.mubr.f32.gmra.mrb[0].mxu0 %v933
    %v1062 = vpop.f32.mrb[0].mxu0
    %v1063 = vadd.f32 0.0, %v1062
    %v1064 = vpop.f32.mrb[0].mxu0
    %1065 = vmatprep.mubr.f32.mxu0 0.0
    %1066 = vmatmul.mubr.f32.gmra.mrb[0].mxu0 %v936
    %v1067 = vpop.f32.mrb[0].mxu0
    %v1068 = vadd.f32 0.0, %v1067
    %v1069 = vpop.f32.mrb[0].mxu0
    %1070 = vmatprep.mubr.f32.mxu0 0.0
    %1071 = vmatmul.mubr.f32.gmra.mrb[0].mxu0 %v939
    %v1072 = vpop.f32.mrb[0].mxu0
    %v1073 = vadd.f32 0.0, %v1072
    %v1074 = vpop.f32.mrb[0].mxu0
    %1075 = vmatprep.mubr.f32.mxu0 0.0
    %1076 = vmatmul.mubr.f32.gmra.mrb[0].mxu0 %v942
    %v1077 = vpop.f32.mrb[0].mxu0
    %v1078 = vadd.f32 0.0, %v1077
    %v1079 = vpop.f32.mrb[0].mxu0
    %1080 = vmatprep.mubr.f32.mxu0 0.0
    %1081 = vmatmul.mubr.f32.gmra.mrb[0].mxu0 %v945
    %v1082 = vpop.f32.mrb[0].mxu0
    %v1083 = vadd.f32 0.0, %v1082
    %v1084 = vpop.f32.mrb[0].mxu0
    %1085 = vmatprep.mubr.f32.mxu0 0.0
    %1086 = vmatmul.mubr.f32.gmra.mrb[0].mxu0 %v948
    %v1087 = vpop.f32.mrb[0].mxu0
    %v1088 = vadd.f32 0.0, %v1087
    %v1089 = vpop.f32.mrb[0].mxu0
    %1090 = vmatprep.mubr.f32.mxu0 0.0
    %1091 = vmatmul.mubr.f32.gmra.mrb[0].mxu0 %v951
    %v1092 = vpop.f32.mrb[0].mxu0
    %v1093 = vadd.f32 0.0, %v1092
    %v1094 = vpop.f32.mrb[0].mxu0
    %1095 = vmatprep.mubr.f32.mxu0 0.0
    %1096 = vmatmul.mubr.f32.gmra.mrb[0].mxu0 %v954
    %v1097 = vpop.f32.mrb[0].mxu0
    %v1098 = vadd.f32 0.0, %v1097
    %v1099 = vpop.f32.mrb[0].mxu0
    %1100 = vdwg.mxu0
    %vm1104 = vcmask 1046528
    %v1105 = vrot.slane %v456, 1
    %v1106 = vrot.slane %v457, 1
    %v1107 = vsel %vm1104, %v1105, %v1106
    %v1108 = vrot.slane %v458, 1
    %v1109 = vsel %vm1104, %v1106, %v1108
    %v1112 = vadd.f32 %v1023, %v1107
    %v1113 = vadd.f32 %v1028, %v1109
    %v1114 = vadd.f32 %v1033, %v1107
    %v1115 = vadd.f32 %v1038, %v1109
    %v1116 = vadd.f32 %v1043, %v1107
    %v1117 = vadd.f32 %v1048, %v1109
    %v1118 = vadd.f32 %v1053, %v1107
    %v1119 = vadd.f32 %v1058, %v1109
    %v1120 = vadd.f32 %v1063, %v1107
    %v1121 = vadd.f32 %v1068, %v1109
    %v1122 = vadd.f32 %v1073, %v1107
    %v1123 = vadd.f32 %v1078, %v1109
    %v1124 = vadd.f32 %v1083, %v1107
    %v1125 = vadd.f32 %v1088, %v1109
    %v1126 = vadd.f32 %v1093, %v1107
    %v1127 = vadd.f32 %v1098, %v1109
    %1128 = vmatprep.subr.mxu0 0.0
    %1129 = vmatpush1.msra.mxu0 %v830
    %1130 = vmatprep.subr.mxu0 0.0
    %1131 = vmatpush1.msra.mxu0 %v831
    %1132 = vmatprep.subr.mxu0 0.0
    %1133 = vmatpush1.msra.mxu0 %v832
    %1134 = vmatprep.subr.mxu0 0.0
    %1135 = vmatpush1.msra.mxu0 %v833
    %1136 = vmatprep.subr.mxu0 0.0
    %1137 = vmatpush1.msra.mxu0 0.0
    %1138 = vmatprep.subr.mxu0 0.0
    %1139 = vmatpush1.msra.mxu0 0.0
    %1140 = vmatprep.subr.mxu0 0.0
    %1141 = vmatpush1.msra.mxu0 0.0
    %1142 = vmatprep.subr.mxu0 0.0
    %1143 = vmatpush1.msra.mxu0 0.0
    %1144 = vmatprep.subr.mxu0 0.0
    %1145 = vmatpush1.msra.mxu0 0.0
    %1146 = vmatprep.subr.mxu0 0.0
    %1147 = vmatpush1.msra.mxu0 0.0
    %1148 = vmatprep.subr.mxu0 0.0
    %1149 = vmatpush1.msra.mxu0 0.0
    %1150 = vmatprep.subr.mxu0 0.0
    %1151 = vmatpush1.msra.mxu0 0.0
    %1152 = vmatprep.subr.mxu0 0.0
    %1153 = vmatpush1.msra.mxu0 0.0
    %1154 = vmatprep.subr.mxu0 0.0
    %1155 = vmatpush1.msra.mxu0 0.0
    %1156 = vmatprep.subr.mxu0 0.0
    %1157 = vmatpush1.msra.mxu0 0.0
    %1158 = vmatprep.subr.mxu0 0.0
    %1159 = vmatpush1.msra.mxu0 0.0
    %1160 = vmatprep.subr.mxu0 0.0
    %1161 = vmatpush1.msra.mxu0 0.0
    %1162 = vmatprep.subr.mxu0 0.0
    %1163 = vmatpush1.msra.mxu0 0.0
    %1164 = vmatprep.subr.mxu0 0.0
    %1165 = vmatpush1.msra.mxu0 0.0
    %1166 = vmatprep.subr.mxu0 0.0
    %1167 = vmatpush1.msra.mxu0 0.0
    %1168 = vmatprep.subr.mxu0 0.0
    %1169 = vmatpush1.msra.mxu0 0.0
    %1170 = vmatprep.subr.mxu0 0.0
    %1171 = vmatpush1.msra.mxu0 0.0
    %1172 = vmatprep.subr.mxu0 0.0
    %1173 = vmatpush1.msra.mxu0 0.0
    %1174 = vmatprep.subr.mxu0 0.0
    %1175 = vmatpush1.msra.mxu0 0.0
    %1176 = vmatprep.subr.mxu0 0.0
    %1177 = vmatpush1.msra.mxu0 0.0
    %1178 = vmatprep.subr.mxu0 0.0
    %1179 = vmatpush1.msra.mxu0 0.0
    %1180 = vmatprep.subr.mxu0 0.0
    %1181 = vmatpush1.msra.mxu0 0.0
    %1182 = vmatprep.subr.mxu0 0.0
    %1183 = vmatpush1.msra.mxu0 0.0
    %1184 = vmatprep.subr.mxu0 0.0
    %1185 = vmatpush1.msra.mxu0 0.0
    %1186 = vmatprep.subr.mxu0 0.0
    %1187 = vmatpush1.msra.mxu0 0.0
    %1188 = vmatprep.subr.mxu0 0.0
    %1189 = vmatpush1.msra.mxu0 0.0
    %1190 = vmatprep.subr.mxu0 0.0
    %1191 = vmatpush1.msra.mxu0 0.0
    %1192 = vmatprep.mubr.f32.mxu0 0.0
    %1193 = vmatmul.mubr.f32.gmra.mrb[0].mxu0 %v909
    %v1194 = vpop.f32.mrb[0].mxu0
    %v1195 = vadd.f32 0.0, %v1194
    %v1196 = vpop.f32.mrb[0].mxu0
    %1197 = vmatprep.mubr.f32.mxu0 0.0
    %1198 = vmatmul.mubr.f32.gmra.mrb[0].mxu0 %v912
    %v1199 = vpop.f32.mrb[0].mxu0
    %v1200 = vadd.f32 0.0, %v1199
    %v1201 = vpop.f32.mrb[0].mxu0
    %1202 = vmatprep.mubr.f32.mxu0 0.0
    %1203 = vmatmul.mubr.f32.gmra.mrb[0].mxu0 %v915
    %v1204 = vpop.f32.mrb[0].mxu0
    %v1205 = vadd.f32 0.0, %v1204
    %v1206 = vpop.f32.mrb[0].mxu0
    %1207 = vmatprep.mubr.f32.mxu0 0.0
    %1208 = vmatmul.mubr.f32.gmra.mrb[0].mxu0 %v918
    %v1209 = vpop.f32.mrb[0].mxu0
    %v1210 = vadd.f32 0.0, %v1209
    %v1211 = vpop.f32.mrb[0].mxu0
    %1212 = vmatprep.mubr.f32.mxu0 0.0
    %1213 = vmatmul.mubr.f32.gmra.mrb[0].mxu0 %v921
    %v1214 = vpop.f32.mrb[0].mxu0
    %v1215 = vadd.f32 0.0, %v1214
    %v1216 = vpop.f32.mrb[0].mxu0
    %1217 = vmatprep.mubr.f32.mxu0 0.0
    %1218 = vmatmul.mubr.f32.gmra.mrb[0].mxu0 %v924
    %v1219 = vpop.f32.mrb[0].mxu0
    %v1220 = vadd.f32 0.0, %v1219
    %v1221 = vpop.f32.mrb[0].mxu0
    %1222 = vmatprep.mubr.f32.mxu0 0.0
    %1223 = vmatmul.mubr.f32.gmra.mrb[0].mxu0 %v927
    %v1224 = vpop.f32.mrb[0].mxu0
    %v1225 = vadd.f32 0.0, %v1224
    %v1226 = vpop.f32.mrb[0].mxu0
    %1227 = vmatprep.mubr.f32.mxu0 0.0
    %1228 = vmatmul.mubr.f32.gmra.mrb[0].mxu0 %v930
    %v1229 = vpop.f32.mrb[0].mxu0
    %v1230 = vadd.f32 0.0, %v1229
    %v1231 = vpop.f32.mrb[0].mxu0
    %1232 = vmatprep.mubr.f32.mxu0 0.0
    %1233 = vmatmul.mubr.f32.gmra.mrb[0].mxu0 %v933
    %v1234 = vpop.f32.mrb[0].mxu0
    %v1235 = vadd.f32 0.0, %v1234
    %v1236 = vpop.f32.mrb[0].mxu0
    %1237 = vmatprep.mubr.f32.mxu0 0.0
    %1238 = vmatmul.mubr.f32.gmra.mrb[0].mxu0 %v936
    %v1239 = vpop.f32.mrb[0].mxu0
    %v1240 = vadd.f32 0.0, %v1239
    %v1241 = vpop.f32.mrb[0].mxu0
    %1242 = vmatprep.mubr.f32.mxu0 0.0
    %1243 = vmatmul.mubr.f32.gmra.mrb[0].mxu0 %v939
    %v1244 = vpop.f32.mrb[0].mxu0
    %v1245 = vadd.f32 0.0, %v1244
    %v1246 = vpop.f32.mrb[0].mxu0
    %1247 = vmatprep.mubr.f32.mxu0 0.0
    %1248 = vmatmul.mubr.f32.gmra.mrb[0].mxu0 %v942
    %v1249 = vpop.f32.mrb[0].mxu0
    %v1250 = vadd.f32 0.0, %v1249
    %v1251 = vpop.f32.mrb[0].mxu0
    %1252 = vmatprep.mubr.f32.mxu0 0.0
    %1253 = vmatmul.mubr.f32.gmra.mrb[0].mxu0 %v945
    %v1254 = vpop.f32.mrb[0].mxu0
    %v1255 = vadd.f32 0.0, %v1254
    %v1256 = vpop.f32.mrb[0].mxu0
    %1257 = vmatprep.mubr.f32.mxu0 0.0
    %1258 = vmatmul.mubr.f32.gmra.mrb[0].mxu0 %v948
    %v1259 = vpop.f32.mrb[0].mxu0
    %v1260 = vadd.f32 0.0, %v1259
    %v1261 = vpop.f32.mrb[0].mxu0
    %1262 = vmatprep.mubr.f32.mxu0 0.0
    %1263 = vmatmul.mubr.f32.gmra.mrb[0].mxu0 %v951
    %v1264 = vpop.f32.mrb[0].mxu0
    %v1265 = vadd.f32 0.0, %v1264
    %v1266 = vpop.f32.mrb[0].mxu0
    %1267 = vmatprep.mubr.f32.mxu0 0.0
    %1268 = vmatmul.mubr.f32.gmra.mrb[0].mxu0 %v954
    %v1269 = vpop.f32.mrb[0].mxu0
    %v1270 = vadd.f32 0.0, %v1269
    %v1271 = vpop.f32.mrb[0].mxu0
    %1272 = vdwg.mxu0
    %v1276 = vrot.slane %v459, 1
    %v1277 = vrot.slane %v460, 1
    %v1278 = vsel %vm1104, %v1276, %v1277
    %v1279 = vrot.slane %v461, 1
    %v1280 = vsel %vm1104, %v1277, %v1279
    %v1283 = vadd.f32 %v1195, %v1278
    %v1284 = vadd.f32 %v1200, %v1280
    %v1285 = vadd.f32 %v1205, %v1278
    %v1286 = vadd.f32 %v1210, %v1280
    %v1287 = vadd.f32 %v1215, %v1278
    %v1288 = vadd.f32 %v1220, %v1280
    %v1289 = vadd.f32 %v1225, %v1278
    %v1290 = vadd.f32 %v1230, %v1280
    %v1291 = vadd.f32 %v1235, %v1278
    %v1292 = vadd.f32 %v1240, %v1280
    %v1293 = vadd.f32 %v1245, %v1278
    %v1294 = vadd.f32 %v1250, %v1280
    %v1295 = vadd.f32 %v1255, %v1278
    %v1296 = vadd.f32 %v1260, %v1280
    %v1297 = vadd.f32 %v1265, %v1278
    %v1298 = vadd.f32 %v1270, %v1280
    %v1299 = vld [vmem:[%s9] sm:$0xff]
    %v1300 = vld [vmem:[%s9 + $0x8] sm:$0xff]
    %v1301 = vld [vmem:[%s9 + $0x10] sm:$0xff]
    %v1302 = vld [vmem:[%s9 + $0x18] sm:$0xff]
    %v1303 = vld [vmem:[%s10] sm:$0xf]
    %v1304 = vmul.f32 %v749, %v827
    %v1306 = vsel %vm679, %v1304, 0
    %1308 = vmatprep.subr.mxu0 0.0
    %1309 = vmatpush1.msra.mxu0 %v1299
    %1310 = vmatprep.subr.mxu0 0.0
    %1311 = vmatpush1.msra.mxu0 %v1300
    %1312 = vmatprep.subr.mxu0 0.0
    %1313 = vmatpush1.msra.mxu0 %v1301
    %1314 = vmatprep.subr.mxu0 0.0
    %1315 = vmatpush1.msra.mxu0 %v1302
    %1316 = vmatprep.subr.mxu0 0.0
    %1317 = vmatpush1.msra.mxu0 0.0
    %1318 = vmatprep.subr.mxu0 0.0
    %1319 = vmatpush1.msra.mxu0 0.0
    %1320 = vmatprep.subr.mxu0 0.0
    %1321 = vmatpush1.msra.mxu0 0.0
    %1322 = vmatprep.subr.mxu0 0.0
    %1323 = vmatpush1.msra.mxu0 0.0
    %1324 = vmatprep.subr.mxu0 0.0
    %1325 = vmatpush1.msra.mxu0 0.0
    %1326 = vmatprep.subr.mxu0 0.0
    %1327 = vmatpush1.msra.mxu0 0.0
    %1328 = vmatprep.subr.mxu0 0.0
    %1329 = vmatpush1.msra.mxu0 0.0
    %1330 = vmatprep.subr.mxu0 0.0
    %1331 = vmatpush1.msra.mxu0 0.0
    %1332 = vmatprep.subr.mxu0 0.0
    %1333 = vmatpush1.msra.mxu0 0.0
    %1334 = vmatprep.subr.mxu0 0.0
    %1335 = vmatpush1.msra.mxu0 0.0
    %1336 = vmatprep.subr.mxu0 0.0
    %1337 = vmatpush1.msra.mxu0 0.0
    %1338 = vmatprep.subr.mxu0 0.0
    %1339 = vmatpush1.msra.mxu0 0.0
    %1340 = vmatprep.subr.mxu0 0.0
    %1341 = vmatpush1.msra.mxu0 0.0
    %1342 = vmatprep.subr.mxu0 0.0
    %1343 = vmatpush1.msra.mxu0 0.0
    %1344 = vmatprep.subr.mxu0 0.0
    %1345 = vmatpush1.msra.mxu0 0.0
    %1346 = vmatprep.subr.mxu0 0.0
    %1347 = vmatpush1.msra.mxu0 0.0
    %1348 = vmatprep.subr.mxu0 0.0
    %1349 = vmatpush1.msra.mxu0 0.0
    %1350 = vmatprep.subr.mxu0 0.0
    %1351 = vmatpush1.msra.mxu0 0.0
    %1352 = vmatprep.subr.mxu0 0.0
    %1353 = vmatpush1.msra.mxu0 0.0
    %1354 = vmatprep.subr.mxu0 0.0
    %1355 = vmatpush1.msra.mxu0 0.0
    %1356 = vmatprep.subr.mxu0 0.0
    %1357 = vmatpush1.msra.mxu0 0.0
    %1358 = vmatprep.subr.mxu0 0.0
    %1359 = vmatpush1.msra.mxu0 0.0
    %1360 = vmatprep.subr.mxu0 0.0
    %1361 = vmatpush1.msra.mxu0 0.0
    %1362 = vmatprep.subr.mxu0 0.0
    %1363 = vmatpush1.msra.mxu0 0.0
    %1364 = vmatprep.subr.mxu0 0.0
    %1365 = vmatpush1.msra.mxu0 0.0
    %1366 = vmatprep.subr.mxu0 0.0
    %1367 = vmatpush1.msra.mxu0 0.0
    %1368 = vmatprep.subr.mxu0 0.0
    %1369 = vmatpush1.msra.mxu0 0.0
    %1370 = vmatprep.subr.mxu0 0.0
    %1371 = vmatpush1.msra.mxu0 0.0
    %1372 = vmatprep.mubr.f32.mxu0 0.0
    %1373 = vmatmul.mubr.f32.gmra.mrb[0].mxu0 %v1306
    %v1374 = vpop.f32.mrb[0].mxu0
    %v1375 = vadd.f32 0.0, %v1374
    %v1376 = vpop.f32.mrb[0].mxu0
    %1377 = vdwg.mxu0
    %v1379 = vcombine.high %v749, %v749
    %v1381 = vunpack.c.l.s4 1966171168
    %v1382 = vunpack.c.0.s8 %v1381
    %v1383 = vlaneseq
    %v1384 = vshrl.u32 %v1383, 7
    %v1385 = vsub.s32 %v1382, %v1384
    %v1386 = vrot.slane %v749, %v1385
    %v1388 = vunpack.c.l.s4 1966171168
    %v1389 = vunpack.c.0.s8 %v1388
    %v1390 = vlaneseq
    %v1391 = vshrl.u32 %v1390, 7
    %v1392 = vsub.s32 %v1389, %v1391
    %v1393 = vrot.slane %v1379, %v1392
    %v1394 = vcombine.high %v1386, %v1386
    %v1395 = vcombine.high %v1393, %v1393
    %v1397 = vunpack.c.l.s4 1966171168
    %v1398 = vunpack.c.0.s8 %v1397
    %v1399 = vlaneseq
    %v1400 = vshrl.u32 %v1399, 7
    %v1401 = vsub.s32 %v1398, %v1400
    %v1402 = vrot.slane %v1386, %v1401
    %v1404 = vunpack.c.l.s4 1966171168
    %v1405 = vunpack.c.0.s8 %v1404
    %v1406 = vlaneseq
    %v1407 = vshrl.u32 %v1406, 7
    %v1408 = vsub.s32 %v1405, %v1407
    %v1409 = vrot.slane %v1393, %v1408
    %v1411 = vunpack.c.l.s4 1966171168
    %v1412 = vunpack.c.0.s8 %v1411
    %v1413 = vlaneseq
    %v1414 = vshrl.u32 %v1413, 7
    %v1415 = vsub.s32 %v1412, %v1414
    %v1416 = vrot.slane %v1394, %v1415
    %v1418 = vunpack.c.l.s4 1966171168
    %v1419 = vunpack.c.0.s8 %v1418
    %v1420 = vlaneseq
    %v1421 = vshrl.u32 %v1420, 7
    %v1422 = vsub.s32 %v1419, %v1421
    %v1423 = vrot.slane %v1395, %v1422
    %v1424 = vcombine.high %v1402, %v1402
    %v1425 = vcombine.high %v1409, %v1409
    %v1426 = vcombine.high %v1416, %v1416
    %v1427 = vcombine.high %v1423, %v1423
    %v1428 = vlaneseq
    %v1429 = vshrl.u32 %v1428, 7
    %v1430 = vsub.s32 0, %v1429
    %v1431 = vrot.slane %v1402, %v1430
    %v1432 = vlaneseq
    %v1433 = vshrl.u32 %v1432, 7
    %v1434 = vsub.s32 0, %v1433
    %v1435 = vrot.slane %v1416, %v1434
    %v1436 = vlaneseq
    %v1437 = vshrl.u32 %v1436, 7
    %v1438 = vsub.s32 0, %v1437
    %v1439 = vrot.slane %v1424, %v1438
    %v1440 = vlaneseq
    %v1441 = vshrl.u32 %v1440, 7
    %v1442 = vsub.s32 0, %v1441
    %v1443 = vrot.slane %v1426, %v1442
    %v1444 = vlaneseq
    %v1445 = vshrl.u32 %v1444, 7
    %v1446 = vsub.s32 0, %v1445
    %v1447 = vrot.slane %v1409, %v1446
    %v1448 = vlaneseq
    %v1449 = vshrl.u32 %v1448, 7
    %v1450 = vsub.s32 0, %v1449
    %v1451 = vrot.slane %v1423, %v1450
    %v1452 = vlaneseq
    %v1453 = vshrl.u32 %v1452, 7
    %v1454 = vsub.s32 0, %v1453
    %v1455 = vrot.slane %v1425, %v1454
    %v1456 = vlaneseq
    %v1457 = vshrl.u32 %v1456, 7
    %v1458 = vsub.s32 0, %v1457
    %v1459 = vrot.slane %v1427, %v1458
    %v1468 = vmul.f32 %v1431, %v1112
    %v1469 = vmul.f32 %v1431, %v1113
    %v1470 = vmul.f32 %v1435, %v1114
    %v1471 = vmul.f32 %v1435, %v1115
    %v1472 = vmul.f32 %v1439, %v1116
    %v1473 = vmul.f32 %v1439, %v1117
    %v1474 = vmul.f32 %v1443, %v1118
    %v1475 = vmul.f32 %v1443, %v1119
    %v1476 = vmul.f32 %v1447, %v1120
    %v1477 = vmul.f32 %v1447, %v1121
    %v1478 = vmul.f32 %v1451, %v1122
    %v1479 = vmul.f32 %v1451, %v1123
    %v1480 = vmul.f32 %v1455, %v1124
    %v1481 = vmul.f32 %v1455, %v1125
    %v1482 = vmul.f32 %v1459, %v1126
    %v1483 = vmul.f32 %v1459, %v1127
    %v1485 = vsel %vm679, %v1468, 0
    %v1488 = vsel %vm679, %v1469, 0
    %v1491 = vsel %vm679, %v1470, 0
    %v1494 = vsel %vm679, %v1471, 0
    %v1497 = vsel %vm679, %v1472, 0
    %v1500 = vsel %vm679, %v1473, 0
    %v1503 = vsel %vm679, %v1474, 0
    %v1506 = vsel %vm679, %v1475, 0
    %v1509 = vsel %vm679, %v1476, 0
    %v1512 = vsel %vm679, %v1477, 0
    %v1515 = vsel %vm679, %v1478, 0
    %v1518 = vsel %vm679, %v1479, 0
    %v1521 = vsel %vm679, %v1480, 0
    %v1524 = vsel %vm679, %v1481, 0
    %v1527 = vsel %vm679, %v1482, 0
    %v1530 = vsel %vm679, %v1483, 0
    %1532 = vmatprep.subr.mxu0 0.0
    %1533 = vmatpush1.msra.mxu0 %v1299
    %1534 = vmatprep.subr.mxu0 0.0
    %1535 = vmatpush1.msra.mxu0 %v1300
    %1536 = vmatprep.subr.mxu0 0.0
    %1537 = vmatpush1.msra.mxu0 %v1301
    %1538 = vmatprep.subr.mxu0 0.0
    %1539 = vmatpush1.msra.mxu0 %v1302
    %1540 = vmatprep.subr.mxu0 0.0
    %1541 = vmatpush1.msra.mxu0 0.0
    %1542 = vmatprep.subr.mxu0 0.0
    %1543 = vmatpush1.msra.mxu0 0.0
    %1544 = vmatprep.subr.mxu0 0.0
    %1545 = vmatpush1.msra.mxu0 0.0
    %1546 = vmatprep.subr.mxu0 0.0
    %1547 = vmatpush1.msra.mxu0 0.0
    %1548 = vmatprep.subr.mxu0 0.0
    %1549 = vmatpush1.msra.mxu0 0.0
    %1550 = vmatprep.subr.mxu0 0.0
    %1551 = vmatpush1.msra.mxu0 0.0
    %1552 = vmatprep.subr.mxu0 0.0
    %1553 = vmatpush1.msra.mxu0 0.0
    %1554 = vmatprep.subr.mxu0 0.0
    %1555 = vmatpush1.msra.mxu0 0.0
    %1556 = vmatprep.subr.mxu0 0.0
    %1557 = vmatpush1.msra.mxu0 0.0
    %1558 = vmatprep.subr.mxu0 0.0
    %1559 = vmatpush1.msra.mxu0 0.0
    %1560 = vmatprep.subr.mxu0 0.0
    %1561 = vmatpush1.msra.mxu0 0.0
    %1562 = vmatprep.subr.mxu0 0.0
    %1563 = vmatpush1.msra.mxu0 0.0
    %1564 = vmatprep.subr.mxu0 0.0
    %1565 = vmatpush1.msra.mxu0 0.0
    %1566 = vmatprep.subr.mxu0 0.0
    %1567 = vmatpush1.msra.mxu0 0.0
    %1568 = vmatprep.subr.mxu0 0.0
    %1569 = vmatpush1.msra.mxu0 0.0
    %1570 = vmatprep.subr.mxu0 0.0
    %1571 = vmatpush1.msra.mxu0 0.0
    %1572 = vmatprep.subr.mxu0 0.0
    %1573 = vmatpush1.msra.mxu0 0.0
    %1574 = vmatprep.subr.mxu0 0.0
    %1575 = vmatpush1.msra.mxu0 0.0
    %1576 = vmatprep.subr.mxu0 0.0
    %1577 = vmatpush1.msra.mxu0 0.0
    %1578 = vmatprep.subr.mxu0 0.0
    %1579 = vmatpush1.msra.mxu0 0.0
    %1580 = vmatprep.subr.mxu0 0.0
    %1581 = vmatpush1.msra.mxu0 0.0
    %1582 = vmatprep.subr.mxu0 0.0
    %1583 = vmatpush1.msra.mxu0 0.0
    %1584 = vmatprep.subr.mxu0 0.0
    %1585 = vmatpush1.msra.mxu0 0.0
    %1586 = vmatprep.subr.mxu0 0.0
    %1587 = vmatpush1.msra.mxu0 0.0
    %1588 = vmatprep.subr.mxu0 0.0
    %1589 = vmatpush1.msra.mxu0 0.0
    %1590 = vmatprep.subr.mxu0 0.0
    %1591 = vmatpush1.msra.mxu0 0.0
    %1592 = vmatprep.subr.mxu0 0.0
    %1593 = vmatpush1.msra.mxu0 0.0
    %1594 = vmatprep.subr.mxu0 0.0
    %1595 = vmatpush1.msra.mxu0 0.0
    %1596 = vmatprep.mubr.f32.mxu0 0.0
    %1597 = vmatmul.mubr.f32.gmra.mrb[0].mxu0 %v1485
    %v1598 = vpop.f32.mrb[0].mxu0
    %v1599 = vadd.f32 0.0, %v1598
    %v1600 = vpop.f32.mrb[0].mxu0
    %1601 = vmatprep.mubr.f32.mxu0 0.0
    %1602 = vmatmul.mubr.f32.gmra.mrb[0].mxu0 %v1488
    %v1603 = vpop.f32.mrb[0].mxu0
    %v1604 = vadd.f32 0.0, %v1603
    %v1605 = vpop.f32.mrb[0].mxu0
    %1606 = vmatprep.mubr.f32.mxu0 0.0
    %1607 = vmatmul.mubr.f32.gmra.mrb[0].mxu0 %v1491
    %v1608 = vpop.f32.mrb[0].mxu0
    %v1609 = vadd.f32 0.0, %v1608
    %v1610 = vpop.f32.mrb[0].mxu0
    %1611 = vmatprep.mubr.f32.mxu0 0.0
    %1612 = vmatmul.mubr.f32.gmra.mrb[0].mxu0 %v1494
    %v1613 = vpop.f32.mrb[0].mxu0
    %v1614 = vadd.f32 0.0, %v1613
    %v1615 = vpop.f32.mrb[0].mxu0
    %1616 = vmatprep.mubr.f32.mxu0 0.0
    %1617 = vmatmul.mubr.f32.gmra.mrb[0].mxu0 %v1497
    %v1618 = vpop.f32.mrb[0].mxu0
    %v1619 = vadd.f32 0.0, %v1618
    %v1620 = vpop.f32.mrb[0].mxu0
    %1621 = vmatprep.mubr.f32.mxu0 0.0
    %1622 = vmatmul.mubr.f32.gmra.mrb[0].mxu0 %v1500
    %v1623 = vpop.f32.mrb[0].mxu0
    %v1624 = vadd.f32 0.0, %v1623
    %v1625 = vpop.f32.mrb[0].mxu0
    %1626 = vmatprep.mubr.f32.mxu0 0.0
    %1627 = vmatmul.mubr.f32.gmra.mrb[0].mxu0 %v1503
    %v1628 = vpop.f32.mrb[0].mxu0
    %v1629 = vadd.f32 0.0, %v1628
    %v1630 = vpop.f32.mrb[0].mxu0
    %1631 = vmatprep.mubr.f32.mxu0 0.0
    %1632 = vmatmul.mubr.f32.gmra.mrb[0].mxu0 %v1506
    %v1633 = vpop.f32.mrb[0].mxu0
    %v1634 = vadd.f32 0.0, %v1633
    %v1635 = vpop.f32.mrb[0].mxu0
    %1636 = vmatprep.mubr.f32.mxu0 0.0
    %1637 = vmatmul.mubr.f32.gmra.mrb[0].mxu0 %v1509
    %v1638 = vpop.f32.mrb[0].mxu0
    %v1639 = vadd.f32 0.0, %v1638
    %v1640 = vpop.f32.mrb[0].mxu0
    %1641 = vmatprep.mubr.f32.mxu0 0.0
    %1642 = vmatmul.mubr.f32.gmra.mrb[0].mxu0 %v1512
    %v1643 = vpop.f32.mrb[0].mxu0
    %v1644 = vadd.f32 0.0, %v1643
    %v1645 = vpop.f32.mrb[0].mxu0
    %1646 = vmatprep.mubr.f32.mxu0 0.0
    %1647 = vmatmul.mubr.f32.gmra.mrb[0].mxu0 %v1515
    %v1648 = vpop.f32.mrb[0].mxu0
    %v1649 = vadd.f32 0.0, %v1648
    %v1650 = vpop.f32.mrb[0].mxu0
    %1651 = vmatprep.mubr.f32.mxu0 0.0
    %1652 = vmatmul.mubr.f32.gmra.mrb[0].mxu0 %v1518
    %v1653 = vpop.f32.mrb[0].mxu0
    %v1654 = vadd.f32 0.0, %v1653
    %v1655 = vpop.f32.mrb[0].mxu0
    %1656 = vmatprep.mubr.f32.mxu0 0.0
    %1657 = vmatmul.mubr.f32.gmra.mrb[0].mxu0 %v1521
    %v1658 = vpop.f32.mrb[0].mxu0
    %v1659 = vadd.f32 0.0, %v1658
    %v1660 = vpop.f32.mrb[0].mxu0
    %1661 = vmatprep.mubr.f32.mxu0 0.0
    %1662 = vmatmul.mubr.f32.gmra.mrb[0].mxu0 %v1524
    %v1663 = vpop.f32.mrb[0].mxu0
    %v1664 = vadd.f32 0.0, %v1663
    %v1665 = vpop.f32.mrb[0].mxu0
    %1666 = vmatprep.mubr.f32.mxu0 0.0
    %1667 = vmatmul.mubr.f32.gmra.mrb[0].mxu0 %v1527
    %v1668 = vpop.f32.mrb[0].mxu0
    %v1669 = vadd.f32 0.0, %v1668
    %v1670 = vpop.f32.mrb[0].mxu0
    %1671 = vmatprep.mubr.f32.mxu0 0.0
    %1672 = vmatmul.mubr.f32.gmra.mrb[0].mxu0 %v1530
    %v1673 = vpop.f32.mrb[0].mxu0
    %v1674 = vadd.f32 0.0, %v1673
    %v1675 = vpop.f32.mrb[0].mxu0
    %1676 = vdwg.mxu0
    %vm1677 = vcmask 31744
    %v1678 = vsel %vm1677, %v1599, -inf
    %v1679 = vsel %vm1677, %v1604, -inf
    %v1680 = vmax.f32 %v1678, %v1679
    %v1681 = vrot.slane %v1680, 4
    %v1682 = vmax.f32 %v1680, %v1681
    %v1683 = vrot.slane %v1682, 2
    %v1684 = vmax.f32 %v1682, %v1683
    %v1685 = vrot.slane %v1684, 1
    %v1686 = vmax.f32 %v1684, %v1685
    %v1687 = vsel %vm1677, %v1609, -inf
    %v1688 = vsel %vm1677, %v1614, -inf
    %v1689 = vmax.f32 %v1687, %v1688
    %v1690 = vrot.slane %v1689, 4
    %v1691 = vmax.f32 %v1689, %v1690
    %v1692 = vrot.slane %v1691, 2
    %v1693 = vmax.f32 %v1691, %v1692
    %v1694 = vrot.slane %v1693, 1
    %v1695 = vmax.f32 %v1693, %v1694
    %v1696 = vsel %vm1677, %v1619, -inf
    %v1697 = vsel %vm1677, %v1624, -inf
    %v1698 = vmax.f32 %v1696, %v1697
    %v1699 = vrot.slane %v1698, 4
    %v1700 = vmax.f32 %v1698, %v1699
    %v1701 = vrot.slane %v1700, 2
    %v1702 = vmax.f32 %v1700, %v1701
    %v1703 = vrot.slane %v1702, 1
    %v1704 = vmax.f32 %v1702, %v1703
    %v1705 = vsel %vm1677, %v1629, -inf
    %v1706 = vsel %vm1677, %v1634, -inf
    %v1707 = vmax.f32 %v1705, %v1706
    %v1708 = vrot.slane %v1707, 4
    %v1709 = vmax.f32 %v1707, %v1708
    %v1710 = vrot.slane %v1709, 2
    %v1711 = vmax.f32 %v1709, %v1710
    %v1712 = vrot.slane %v1711, 1
    %v1713 = vmax.f32 %v1711, %v1712
    %v1714 = vsel %vm1677, %v1639, -inf
    %v1715 = vsel %vm1677, %v1644, -inf
    %v1716 = vmax.f32 %v1714, %v1715
    %v1717 = vrot.slane %v1716, 4
    %v1718 = vmax.f32 %v1716, %v1717
    %v1719 = vrot.slane %v1718, 2
    %v1720 = vmax.f32 %v1718, %v1719
    %v1721 = vrot.slane %v1720, 1
    %v1722 = vmax.f32 %v1720, %v1721
    %v1723 = vsel %vm1677, %v1649, -inf
    %v1724 = vsel %vm1677, %v1654, -inf
    %v1725 = vmax.f32 %v1723, %v1724
    %v1726 = vrot.slane %v1725, 4
    %v1727 = vmax.f32 %v1725, %v1726
    %v1728 = vrot.slane %v1727, 2
    %v1729 = vmax.f32 %v1727, %v1728
    %v1730 = vrot.slane %v1729, 1
    %v1731 = vmax.f32 %v1729, %v1730
    %v1732 = vsel %vm1677, %v1659, -inf
    %v1733 = vsel %vm1677, %v1664, -inf
    %v1734 = vmax.f32 %v1732, %v1733
    %v1735 = vrot.slane %v1734, 4
    %v1736 = vmax.f32 %v1734, %v1735
    %v1737 = vrot.slane %v1736, 2
    %v1738 = vmax.f32 %v1736, %v1737
    %v1739 = vrot.slane %v1738, 1
    %v1740 = vmax.f32 %v1738, %v1739
    %v1741 = vsel %vm1677, %v1669, -inf
    %v1742 = vsel %vm1677, %v1674, -inf
    %v1743 = vmax.f32 %v1741, %v1742
    %v1744 = vrot.slane %v1743, 4
    %v1745 = vmax.f32 %v1743, %v1744
    %v1746 = vrot.slane %v1745, 2
    %v1747 = vmax.f32 %v1745, %v1746
    %v1748 = vrot.slane %v1747, 1
    %v1749 = vmax.f32 %v1747, %v1748
    %v1758 = vsel %vm665, %v1695, %v1686
    %v1759 = vsel %vm667, %v1704, %v1758
    %v1760 = vsel %vm669, %v1713, %v1759
    %v1761 = vsel %vm671, %v1722, %v1760
    %v1762 = vsel %vm673, %v1731, %v1761
    %v1763 = vsel %vm675, %v1740, %v1762
    %v1764 = vsel %vm677, %v1749, %v1763
    %v1766 = vmax.f32 %v1375, %v1764
    %v1767 = vsub.f32 %v1375, %v1766
    %v1768 = vmul.f32 %v1767, 1.442695
    %v1769 = vpow.pop %v1768
    %v1771 = vcombine.high %v1766, %v1766
    %v1773 = vunpack.c.l.s4 1966171168
    %v1774 = vunpack.c.0.s8 %v1773
    %v1775 = vlaneseq
    %v1776 = vshrl.u32 %v1775, 7
    %v1777 = vsub.s32 %v1774, %v1776
    %v1778 = vrot.slane %v1766, %v1777
    %v1780 = vunpack.c.l.s4 1966171168
    %v1781 = vunpack.c.0.s8 %v1780
    %v1782 = vlaneseq
    %v1783 = vshrl.u32 %v1782, 7
    %v1784 = vsub.s32 %v1781, %v1783
    %v1785 = vrot.slane %v1771, %v1784
    %v1786 = vcombine.high %v1778, %v1778
    %v1787 = vcombine.high %v1785, %v1785
    %v1789 = vunpack.c.l.s4 1966171168
    %v1790 = vunpack.c.0.s8 %v1789
    %v1791 = vlaneseq
    %v1792 = vshrl.u32 %v1791, 7
    %v1793 = vsub.s32 %v1790, %v1792
    %v1794 = vrot.slane %v1778, %v1793
    %v1796 = vunpack.c.l.s4 1966171168
    %v1797 = vunpack.c.0.s8 %v1796
    %v1798 = vlaneseq
    %v1799 = vshrl.u32 %v1798, 7
    %v1800 = vsub.s32 %v1797, %v1799
    %v1801 = vrot.slane %v1785, %v1800
    %v1803 = vunpack.c.l.s4 1966171168
    %v1804 = vunpack.c.0.s8 %v1803
    %v1805 = vlaneseq
    %v1806 = vshrl.u32 %v1805, 7
    %v1807 = vsub.s32 %v1804, %v1806
    %v1808 = vrot.slane %v1786, %v1807
    %v1810 = vunpack.c.l.s4 1966171168
    %v1811 = vunpack.c.0.s8 %v1810
    %v1812 = vlaneseq
    %v1813 = vshrl.u32 %v1812, 7
    %v1814 = vsub.s32 %v1811, %v1813
    %v1815 = vrot.slane %v1787, %v1814
    %v1816 = vcombine.high %v1794, %v1794
    %v1817 = vcombine.high %v1801, %v1801
    %v1818 = vcombine.high %v1808, %v1808
    %v1819 = vcombine.high %v1815, %v1815
    %v1820 = vlaneseq
    %v1821 = vshrl.u32 %v1820, 7
    %v1822 = vsub.s32 0, %v1821
    %v1823 = vrot.slane %v1794, %v1822
    %v1824 = vlaneseq
    %v1825 = vshrl.u32 %v1824, 7
    %v1826 = vsub.s32 0, %v1825
    %v1827 = vrot.slane %v1808, %v1826
    %v1828 = vlaneseq
    %v1829 = vshrl.u32 %v1828, 7
    %v1830 = vsub.s32 0, %v1829
    %v1831 = vrot.slane %v1816, %v1830
    %v1832 = vlaneseq
    %v1833 = vshrl.u32 %v1832, 7
    %v1834 = vsub.s32 0, %v1833
    %v1835 = vrot.slane %v1818, %v1834
    %v1836 = vlaneseq
    %v1837 = vshrl.u32 %v1836, 7
    %v1838 = vsub.s32 0, %v1837
    %v1839 = vrot.slane %v1801, %v1838
    %v1840 = vlaneseq
    %v1841 = vshrl.u32 %v1840, 7
    %v1842 = vsub.s32 0, %v1841
    %v1843 = vrot.slane %v1815, %v1842
    %v1844 = vlaneseq
    %v1845 = vshrl.u32 %v1844, 7
    %v1846 = vsub.s32 0, %v1845
    %v1847 = vrot.slane %v1817, %v1846
    %v1848 = vlaneseq
    %v1849 = vshrl.u32 %v1848, 7
    %v1850 = vsub.s32 0, %v1849
    %v1851 = vrot.slane %v1819, %v1850
    %v1860 = vsub.f32 %v1599, %v1823
    %v1861 = vsub.f32 %v1604, %v1823
    %v1862 = vsub.f32 %v1609, %v1827
    %v1863 = vsub.f32 %v1614, %v1827
    %v1864 = vsub.f32 %v1619, %v1831
    %v1865 = vsub.f32 %v1624, %v1831
    %v1866 = vsub.f32 %v1629, %v1835
    %v1867 = vsub.f32 %v1634, %v1835
    %v1868 = vsub.f32 %v1639, %v1839
    %v1869 = vsub.f32 %v1644, %v1839
    %v1870 = vsub.f32 %v1649, %v1843
    %v1871 = vsub.f32 %v1654, %v1843
    %v1872 = vsub.f32 %v1659, %v1847
    %v1873 = vsub.f32 %v1664, %v1847
    %v1874 = vsub.f32 %v1669, %v1851
    %v1875 = vsub.f32 %v1674, %v1851
    %v1876 = vmul.f32 %v1860, 1.442695
    %v1877 = vpow.pop %v1876
    %v1878 = vmul.f32 %v1861, 1.442695
    %v1879 = vpow.pop %v1878
    %v1880 = vmul.f32 %v1862, 1.442695
    %v1881 = vpow.pop %v1880
    %v1882 = vmul.f32 %v1863, 1.442695
    %v1883 = vpow.pop %v1882
    %v1884 = vmul.f32 %v1864, 1.442695
    %v1885 = vpow.pop %v1884
    %v1886 = vmul.f32 %v1865, 1.442695
    %v1887 = vpow.pop %v1886
    %v1888 = vmul.f32 %v1866, 1.442695
    %v1889 = vpow.pop %v1888
    %v1890 = vmul.f32 %v1867, 1.442695
    %v1891 = vpow.pop %v1890
    %v1892 = vmul.f32 %v1868, 1.442695
    %v1893 = vpow.pop %v1892
    %v1894 = vmul.f32 %v1869, 1.442695
    %v1895 = vpow.pop %v1894
    %v1896 = vmul.f32 %v1870, 1.442695
    %v1897 = vpow.pop %v1896
    %v1898 = vmul.f32 %v1871, 1.442695
    %v1899 = vpow.pop %v1898
    %v1900 = vmul.f32 %v1872, 1.442695
    %v1901 = vpow.pop %v1900
    %v1902 = vmul.f32 %v1873, 1.442695
    %v1903 = vpow.pop %v1902
    %v1904 = vmul.f32 %v1874, 1.442695
    %v1905 = vpow.pop %v1904
    %v1906 = vmul.f32 %v1875, 1.442695
    %v1907 = vpow.pop %v1906
    %v1908 = vsel %vm1677, %v1877, 0.0
    %v1909 = vsel %vm1677, %v1879, 0.0
    %v1910 = vadd.f32 %v1908, %v1909
    %v1911 = vrot.slane %v1910, 4
    %v1912 = vadd.f32 %v1910, %v1911
    %v1913 = vrot.slane %v1912, 2
    %v1914 = vadd.f32 %v1912, %v1913
    %v1915 = vrot.slane %v1914, 1
    %v1916 = vadd.f32 %v1914, %v1915
    %v1917 = vsel %vm1677, %v1881, 0.0
    %v1918 = vsel %vm1677, %v1883, 0.0
    %v1919 = vadd.f32 %v1917, %v1918
    %v1920 = vrot.slane %v1919, 4
    %v1921 = vadd.f32 %v1919, %v1920
    %v1922 = vrot.slane %v1921, 2
    %v1923 = vadd.f32 %v1921, %v1922
    %v1924 = vrot.slane %v1923, 1
    %v1925 = vadd.f32 %v1923, %v1924
    %v1926 = vsel %vm1677, %v1885, 0.0
    %v1927 = vsel %vm1677, %v1887, 0.0
    %v1928 = vadd.f32 %v1926, %v1927
    %v1929 = vrot.slane %v1928, 4
    %v1930 = vadd.f32 %v1928, %v1929
    %v1931 = vrot.slane %v1930, 2
    %v1932 = vadd.f32 %v1930, %v1931
    %v1933 = vrot.slane %v1932, 1
    %v1934 = vadd.f32 %v1932, %v1933
    %v1935 = vsel %vm1677, %v1889, 0.0
    %v1936 = vsel %vm1677, %v1891, 0.0
    %v1937 = vadd.f32 %v1935, %v1936
    %v1938 = vrot.slane %v1937, 4
    %v1939 = vadd.f32 %v1937, %v1938
    %v1940 = vrot.slane %v1939, 2
    %v1941 = vadd.f32 %v1939, %v1940
    %v1942 = vrot.slane %v1941, 1
    %v1943 = vadd.f32 %v1941, %v1942
    %v1944 = vsel %vm1677, %v1893, 0.0
    %v1945 = vsel %vm1677, %v1895, 0.0
    %v1946 = vadd.f32 %v1944, %v1945
    %v1947 = vrot.slane %v1946, 4
    %v1948 = vadd.f32 %v1946, %v1947
    %v1949 = vrot.slane %v1948, 2
    %v1950 = vadd.f32 %v1948, %v1949
    %v1951 = vrot.slane %v1950, 1
    %v1952 = vadd.f32 %v1950, %v1951
    %v1953 = vsel %vm1677, %v1897, 0.0
    %v1954 = vsel %vm1677, %v1899, 0.0
    %v1955 = vadd.f32 %v1953, %v1954
    %v1956 = vrot.slane %v1955, 4
    %v1957 = vadd.f32 %v1955, %v1956
    %v1958 = vrot.slane %v1957, 2
    %v1959 = vadd.f32 %v1957, %v1958
    %v1960 = vrot.slane %v1959, 1
    %v1961 = vadd.f32 %v1959, %v1960
    %v1962 = vsel %vm1677, %v1901, 0.0
    %v1963 = vsel %vm1677, %v1903, 0.0
    %v1964 = vadd.f32 %v1962, %v1963
    %v1965 = vrot.slane %v1964, 4
    %v1966 = vadd.f32 %v1964, %v1965
    %v1967 = vrot.slane %v1966, 2
    %v1968 = vadd.f32 %v1966, %v1967
    %v1969 = vrot.slane %v1968, 1
    %v1970 = vadd.f32 %v1968, %v1969
    %v1971 = vsel %vm1677, %v1905, 0.0
    %v1972 = vsel %vm1677, %v1907, 0.0
    %v1973 = vadd.f32 %v1971, %v1972
    %v1974 = vrot.slane %v1973, 4
    %v1975 = vadd.f32 %v1973, %v1974
    %v1976 = vrot.slane %v1975, 2
    %v1977 = vadd.f32 %v1975, %v1976
    %v1978 = vrot.slane %v1977, 1
    %v1979 = vadd.f32 %v1977, %v1978
    %v1988 = vsel %vm665, %v1925, %v1916
    %v1989 = vsel %vm667, %v1934, %v1988
    %v1990 = vsel %vm669, %v1943, %v1989
    %v1991 = vsel %vm671, %v1952, %v1990
    %v1992 = vsel %vm673, %v1961, %v1991
    %v1993 = vsel %vm675, %v1970, %v1992
    %v1994 = vsel %vm677, %v1979, %v1993
    %v1996 = vadd.f32 %v1769, %v1994
    %v1997 = vrcp.pop %v1996
    %v1998 = vmul.f32 %v1996, %v1997
    %v1999 = vsub.f32 2.0, %v1998
    %v2000 = vmul.f32 %v1997, %v1999
    %v2001 = vmul.f32 %v1769, %v2000
    %v2003 = vsel %vm1677, %v2001, 0
    %vm2005 = vcmask 1043456
    %v2007 = vsel %vm2005, %v1303, 0
    %2009 = vmatprep.subr.mxu0 0.0
    %2010 = vmatpush1.msra.mxu0 %v2007
    %2011 = vmatprep.subr.mxu0 0.0
    %2012 = vmatpush1.msra.mxu0 0.0
    %2013 = vmatprep.subr.mxu0 0.0
    %2014 = vmatpush1.msra.mxu0 0.0
    %2015 = vmatprep.subr.mxu0 0.0
    %2016 = vmatpush1.msra.mxu0 0.0
    %2017 = vmatprep.subr.mxu0 0.0
    %2018 = vmatpush1.msra.mxu0 0.0
    %2019 = vmatprep.subr.mxu0 0.0
    %2020 = vmatpush1.msra.mxu0 0.0
    %2021 = vmatprep.subr.mxu0 0.0
    %2022 = vmatpush1.msra.mxu0 0.0
    %2023 = vmatprep.subr.mxu0 0.0
    %2024 = vmatpush1.msra.mxu0 0.0
    %2025 = vmatprep.subr.mxu0 0.0
    %2026 = vmatpush1.msra.mxu0 0.0
    %2027 = vmatprep.subr.mxu0 0.0
    %2028 = vmatpush1.msra.mxu0 0.0
    %2029 = vmatprep.subr.mxu0 0.0
    %2030 = vmatpush1.msra.mxu0 0.0
    %2031 = vmatprep.subr.mxu0 0.0
    %2032 = vmatpush1.msra.mxu0 0.0
    %2033 = vmatprep.subr.mxu0 0.0
    %2034 = vmatpush1.msra.mxu0 0.0
    %2035 = vmatprep.subr.mxu0 0.0
    %2036 = vmatpush1.msra.mxu0 0.0
    %2037 = vmatprep.subr.mxu0 0.0
    %2038 = vmatpush1.msra.mxu0 0.0
    %2039 = vmatprep.subr.mxu0 0.0
    %2040 = vmatpush1.msra.mxu0 0.0
    %2041 = vmatprep.subr.mxu0 0.0
    %2042 = vmatpush1.msra.mxu0 0.0
    %2043 = vmatprep.subr.mxu0 0.0
    %2044 = vmatpush1.msra.mxu0 0.0
    %2045 = vmatprep.subr.mxu0 0.0
    %2046 = vmatpush1.msra.mxu0 0.0
    %2047 = vmatprep.subr.mxu0 0.0
    %2048 = vmatpush1.msra.mxu0 0.0
    %2049 = vmatprep.subr.mxu0 0.0
    %2050 = vmatpush1.msra.mxu0 0.0
    %2051 = vmatprep.subr.mxu0 0.0
    %2052 = vmatpush1.msra.mxu0 0.0
    %2053 = vmatprep.subr.mxu0 0.0
    %2054 = vmatpush1.msra.mxu0 0.0
    %2055 = vmatprep.subr.mxu0 0.0
    %2056 = vmatpush1.msra.mxu0 0.0
    %2057 = vmatprep.subr.mxu0 0.0
    %2058 = vmatpush1.msra.mxu0 0.0
    %2059 = vmatprep.subr.mxu0 0.0
    %2060 = vmatpush1.msra.mxu0 0.0
    %2061 = vmatprep.subr.mxu0 0.0
    %2062 = vmatpush1.msra.mxu0 0.0
    %2063 = vmatprep.subr.mxu0 0.0
    %2064 = vmatpush1.msra.mxu0 0.0
    %2065 = vmatprep.subr.mxu0 0.0
    %2066 = vmatpush1.msra.mxu0 0.0
    %2067 = vmatprep.subr.mxu0 0.0
    %2068 = vmatpush1.msra.mxu0 0.0
    %2069 = vmatprep.subr.mxu0 0.0
    %2070 = vmatpush1.msra.mxu0 0.0
    %2071 = vmatprep.subr.mxu0 0.0
    %2072 = vmatpush1.msra.mxu0 0.0
    %2073 = vmatprep.mubr.f32.mxu0 0.0
    %2074 = vmatmul.mubr.f32.gmra.mrb[0].mxu0 %v2003
    %v2075 = vpop.f32.mrb[0].mxu0
    %v2076 = vadd.f32 0.0, %v2075
    %v2077 = vpop.f32.mrb[0].mxu0
    %2078 = vdwg.mxu0
    %v2080 = vcombine.high %v2000, %v2000
    %v2082 = vunpack.c.l.s4 1966171168
    %v2083 = vunpack.c.0.s8 %v2082
    %v2084 = vlaneseq
    %v2085 = vshrl.u32 %v2084, 7
    %v2086 = vsub.s32 %v2083, %v2085
    %v2087 = vrot.slane %v2000, %v2086
    %v2089 = vunpack.c.l.s4 1966171168
    %v2090 = vunpack.c.0.s8 %v2089
    %v2091 = vlaneseq
    %v2092 = vshrl.u32 %v2091, 7
    %v2093 = vsub.s32 %v2090, %v2092
    %v2094 = vrot.slane %v2080, %v2093
    %v2095 = vcombine.high %v2087, %v2087
    %v2096 = vcombine.high %v2094, %v2094
    %v2098 = vunpack.c.l.s4 1966171168
    %v2099 = vunpack.c.0.s8 %v2098
    %v2100 = vlaneseq
    %v2101 = vshrl.u32 %v2100, 7
    %v2102 = vsub.s32 %v2099, %v2101
    %v2103 = vrot.slane %v2087, %v2102
    %v2105 = vunpack.c.l.s4 1966171168
    %v2106 = vunpack.c.0.s8 %v2105
    %v2107 = vlaneseq
    %v2108 = vshrl.u32 %v2107, 7
    %v2109 = vsub.s32 %v2106, %v2108
    %v2110 = vrot.slane %v2094, %v2109
    %v2112 = vunpack.c.l.s4 1966171168
    %v2113 = vunpack.c.0.s8 %v2112
    %v2114 = vlaneseq
    %v2115 = vshrl.u32 %v2114, 7
    %v2116 = vsub.s32 %v2113, %v2115
    %v2117 = vrot.slane %v2095, %v2116
    %v2119 = vunpack.c.l.s4 1966171168
    %v2120 = vunpack.c.0.s8 %v2119
    %v2121 = vlaneseq
    %v2122 = vshrl.u32 %v2121, 7
    %v2123 = vsub.s32 %v2120, %v2122
    %v2124 = vrot.slane %v2096, %v2123
    %v2125 = vcombine.high %v2103, %v2103
    %v2126 = vcombine.high %v2110, %v2110
    %v2127 = vcombine.high %v2117, %v2117
    %v2128 = vcombine.high %v2124, %v2124
    %v2129 = vlaneseq
    %v2130 = vshrl.u32 %v2129, 7
    %v2131 = vsub.s32 0, %v2130
    %v2132 = vrot.slane %v2103, %v2131
    %v2133 = vlaneseq
    %v2134 = vshrl.u32 %v2133, 7
    %v2135 = vsub.s32 0, %v2134
    %v2136 = vrot.slane %v2117, %v2135
    %v2137 = vlaneseq
    %v2138 = vshrl.u32 %v2137, 7
    %v2139 = vsub.s32 0, %v2138
    %v2140 = vrot.slane %v2125, %v2139
    %v2141 = vlaneseq
    %v2142 = vshrl.u32 %v2141, 7
    %v2143 = vsub.s32 0, %v2142
    %v2144 = vrot.slane %v2127, %v2143
    %v2145 = vlaneseq
    %v2146 = vshrl.u32 %v2145, 7
    %v2147 = vsub.s32 0, %v2146
    %v2148 = vrot.slane %v2110, %v2147
    %v2149 = vlaneseq
    %v2150 = vshrl.u32 %v2149, 7
    %v2151 = vsub.s32 0, %v2150
    %v2152 = vrot.slane %v2124, %v2151
    %v2153 = vlaneseq
    %v2154 = vshrl.u32 %v2153, 7
    %v2155 = vsub.s32 0, %v2154
    %v2156 = vrot.slane %v2126, %v2155
    %v2157 = vlaneseq
    %v2158 = vshrl.u32 %v2157, 7
    %v2159 = vsub.s32 0, %v2158
    %v2160 = vrot.slane %v2128, %v2159
    %v2169 = vmul.f32 %v1877, %v2132
    %v2170 = vmul.f32 %v1879, %v2132
    %v2171 = vmul.f32 %v1881, %v2136
    %v2172 = vmul.f32 %v1883, %v2136
    %v2173 = vmul.f32 %v1885, %v2140
    %v2174 = vmul.f32 %v1887, %v2140
    %v2175 = vmul.f32 %v1889, %v2144
    %v2176 = vmul.f32 %v1891, %v2144
    %v2177 = vmul.f32 %v1893, %v2148
    %v2178 = vmul.f32 %v1895, %v2148
    %v2179 = vmul.f32 %v1897, %v2152
    %v2180 = vmul.f32 %v1899, %v2152
    %v2181 = vmul.f32 %v1901, %v2156
    %v2182 = vmul.f32 %v1903, %v2156
    %v2183 = vmul.f32 %v1905, %v2160
    %v2184 = vmul.f32 %v1907, %v2160
    %v2186 = vsel %vm1677, %v2169, 0
    %v2189 = vsel %vm1677, %v2170, 0
    %v2192 = vsel %vm1677, %v2171, 0
    %v2195 = vsel %vm1677, %v2172, 0
    %v2198 = vsel %vm1677, %v2173, 0
    %v2201 = vsel %vm1677, %v2174, 0
    %v2204 = vsel %vm1677, %v2175, 0
    %v2207 = vsel %vm1677, %v2176, 0
    %v2210 = vsel %vm1677, %v2177, 0
    %v2213 = vsel %vm1677, %v2178, 0
    %v2216 = vsel %vm1677, %v2179, 0
    %v2219 = vsel %vm1677, %v2180, 0
    %v2222 = vsel %vm1677, %v2181, 0
    %v2225 = vsel %vm1677, %v2182, 0
    %v2228 = vsel %vm1677, %v2183, 0
    %v2231 = vsel %vm1677, %v2184, 0
    %2233 = vmatprep.subr.mxu0 0.0
    %2234 = vmatpush1.msra.mxu0 %v2007
    %2235 = vmatprep.subr.mxu0 0.0
    %2236 = vmatpush1.msra.mxu0 0.0
    %2237 = vmatprep.subr.mxu0 0.0
    %2238 = vmatpush1.msra.mxu0 0.0
    %2239 = vmatprep.subr.mxu0 0.0
    %2240 = vmatpush1.msra.mxu0 0.0
    %2241 = vmatprep.subr.mxu0 0.0
    %2242 = vmatpush1.msra.mxu0 0.0
    %2243 = vmatprep.subr.mxu0 0.0
    %2244 = vmatpush1.msra.mxu0 0.0
    %2245 = vmatprep.subr.mxu0 0.0
    %2246 = vmatpush1.msra.mxu0 0.0
    %2247 = vmatprep.subr.mxu0 0.0
    %2248 = vmatpush1.msra.mxu0 0.0
    %2249 = vmatprep.subr.mxu0 0.0
    %2250 = vmatpush1.msra.mxu0 0.0
    %2251 = vmatprep.subr.mxu0 0.0
    %2252 = vmatpush1.msra.mxu0 0.0
    %2253 = vmatprep.subr.mxu0 0.0
    %2254 = vmatpush1.msra.mxu0 0.0
    %2255 = vmatprep.subr.mxu0 0.0
    %2256 = vmatpush1.msra.mxu0 0.0
    %2257 = vmatprep.subr.mxu0 0.0
    %2258 = vmatpush1.msra.mxu0 0.0
    %2259 = vmatprep.subr.mxu0 0.0
    %2260 = vmatpush1.msra.mxu0 0.0
    %2261 = vmatprep.subr.mxu0 0.0
    %2262 = vmatpush1.msra.mxu0 0.0
    %2263 = vmatprep.subr.mxu0 0.0
    %2264 = vmatpush1.msra.mxu0 0.0
    %2265 = vmatprep.subr.mxu0 0.0
    %2266 = vmatpush1.msra.mxu0 0.0
    %2267 = vmatprep.subr.mxu0 0.0
    %2268 = vmatpush1.msra.mxu0 0.0
    %2269 = vmatprep.subr.mxu0 0.0
    %2270 = vmatpush1.msra.mxu0 0.0
    %2271 = vmatprep.subr.mxu0 0.0
    %2272 = vmatpush1.msra.mxu0 0.0
    %2273 = vmatprep.subr.mxu0 0.0
    %2274 = vmatpush1.msra.mxu0 0.0
    %2275 = vmatprep.subr.mxu0 0.0
    %2276 = vmatpush1.msra.mxu0 0.0
    %2277 = vmatprep.subr.mxu0 0.0
    %2278 = vmatpush1.msra.mxu0 0.0
    %2279 = vmatprep.subr.mxu0 0.0
    %2280 = vmatpush1.msra.mxu0 0.0
    %2281 = vmatprep.subr.mxu0 0.0
    %2282 = vmatpush1.msra.mxu0 0.0
    %2283 = vmatprep.subr.mxu0 0.0
    %2284 = vmatpush1.msra.mxu0 0.0
    %2285 = vmatprep.subr.mxu0 0.0
    %2286 = vmatpush1.msra.mxu0 0.0
    %2287 = vmatprep.subr.mxu0 0.0
    %2288 = vmatpush1.msra.mxu0 0.0
    %2289 = vmatprep.subr.mxu0 0.0
    %2290 = vmatpush1.msra.mxu0 0.0
    %2291 = vmatprep.subr.mxu0 0.0
    %2292 = vmatpush1.msra.mxu0 0.0
    %2293 = vmatprep.subr.mxu0 0.0
    %2294 = vmatpush1.msra.mxu0 0.0
    %2295 = vmatprep.subr.mxu0 0.0
    %2296 = vmatpush1.msra.mxu0 0.0
    %2297 = vmatprep.mubr.f32.mxu0 0.0
    %2298 = vmatmul.mubr.f32.gmra.mrb[0].mxu0 %v2186
    %v2299 = vpop.f32.mrb[0].mxu0
    %v2300 = vadd.f32 0.0, %v2299
    %v2301 = vpop.f32.mrb[0].mxu0
    %2302 = vmatprep.mubr.f32.mxu0 0.0
    %2303 = vmatmul.mubr.f32.gmra.mrb[0].mxu0 %v2189
    %v2304 = vpop.f32.mrb[0].mxu0
    %v2305 = vadd.f32 0.0, %v2304
    %v2306 = vpop.f32.mrb[0].mxu0
    %2307 = vmatprep.mubr.f32.mxu0 0.0
    %2308 = vmatmul.mubr.f32.gmra.mrb[0].mxu0 %v2192
    %v2309 = vpop.f32.mrb[0].mxu0
    %v2310 = vadd.f32 0.0, %v2309
    %v2311 = vpop.f32.mrb[0].mxu0
    %2312 = vmatprep.mubr.f32.mxu0 0.0
    %2313 = vmatmul.mubr.f32.gmra.mrb[0].mxu0 %v2195
    %v2314 = vpop.f32.mrb[0].mxu0
    %v2315 = vadd.f32 0.0, %v2314
    %v2316 = vpop.f32.mrb[0].mxu0
    %2317 = vmatprep.mubr.f32.mxu0 0.0
    %2318 = vmatmul.mubr.f32.gmra.mrb[0].mxu0 %v2198
    %v2319 = vpop.f32.mrb[0].mxu0
    %v2320 = vadd.f32 0.0, %v2319
    %v2321 = vpop.f32.mrb[0].mxu0
    %2322 = vmatprep.mubr.f32.mxu0 0.0
    %2323 = vmatmul.mubr.f32.gmra.mrb[0].mxu0 %v2201
    %v2324 = vpop.f32.mrb[0].mxu0
    %v2325 = vadd.f32 0.0, %v2324
    %v2326 = vpop.f32.mrb[0].mxu0
    %2327 = vmatprep.mubr.f32.mxu0 0.0
    %2328 = vmatmul.mubr.f32.gmra.mrb[0].mxu0 %v2204
    %v2329 = vpop.f32.mrb[0].mxu0
    %v2330 = vadd.f32 0.0, %v2329
    %v2331 = vpop.f32.mrb[0].mxu0
    %2332 = vmatprep.mubr.f32.mxu0 0.0
    %2333 = vmatmul.mubr.f32.gmra.mrb[0].mxu0 %v2207
    %v2334 = vpop.f32.mrb[0].mxu0
    %v2335 = vadd.f32 0.0, %v2334
    %v2336 = vpop.f32.mrb[0].mxu0
    %2337 = vmatprep.mubr.f32.mxu0 0.0
    %2338 = vmatmul.mubr.f32.gmra.mrb[0].mxu0 %v2210
    %v2339 = vpop.f32.mrb[0].mxu0
    %v2340 = vadd.f32 0.0, %v2339
    %v2341 = vpop.f32.mrb[0].mxu0
    %2342 = vmatprep.mubr.f32.mxu0 0.0
    %2343 = vmatmul.mubr.f32.gmra.mrb[0].mxu0 %v2213
    %v2344 = vpop.f32.mrb[0].mxu0
    %v2345 = vadd.f32 0.0, %v2344
    %v2346 = vpop.f32.mrb[0].mxu0
    %2347 = vmatprep.mubr.f32.mxu0 0.0
    %2348 = vmatmul.mubr.f32.gmra.mrb[0].mxu0 %v2216
    %v2349 = vpop.f32.mrb[0].mxu0
    %v2350 = vadd.f32 0.0, %v2349
    %v2351 = vpop.f32.mrb[0].mxu0
    %2352 = vmatprep.mubr.f32.mxu0 0.0
    %2353 = vmatmul.mubr.f32.gmra.mrb[0].mxu0 %v2219
    %v2354 = vpop.f32.mrb[0].mxu0
    %v2355 = vadd.f32 0.0, %v2354
    %v2356 = vpop.f32.mrb[0].mxu0
    %2357 = vmatprep.mubr.f32.mxu0 0.0
    %2358 = vmatmul.mubr.f32.gmra.mrb[0].mxu0 %v2222
    %v2359 = vpop.f32.mrb[0].mxu0
    %v2360 = vadd.f32 0.0, %v2359
    %v2361 = vpop.f32.mrb[0].mxu0
    %2362 = vmatprep.mubr.f32.mxu0 0.0
    %2363 = vmatmul.mubr.f32.gmra.mrb[0].mxu0 %v2225
    %v2364 = vpop.f32.mrb[0].mxu0
    %v2365 = vadd.f32 0.0, %v2364
    %v2366 = vpop.f32.mrb[0].mxu0
    %2367 = vmatprep.mubr.f32.mxu0 0.0
    %2368 = vmatmul.mubr.f32.gmra.mrb[0].mxu0 %v2228
    %v2369 = vpop.f32.mrb[0].mxu0
    %v2370 = vadd.f32 0.0, %v2369
    %v2371 = vpop.f32.mrb[0].mxu0
    %2372 = vmatprep.mubr.f32.mxu0 0.0
    %2373 = vmatmul.mubr.f32.gmra.mrb[0].mxu0 %v2231
    %v2374 = vpop.f32.mrb[0].mxu0
    %v2375 = vadd.f32 0.0, %v2374
    %v2376 = vpop.f32.mrb[0].mxu0
    %2377 = vdwg.mxu0
    %v2378 = vmul.f32 %v2076, %v905
    %v2379 = vmul.f32 %v2300, %v1283
    %v2380 = vmul.f32 %v2305, %v1284
    %v2381 = vmul.f32 %v2310, %v1285
    %v2382 = vmul.f32 %v2315, %v1286
    %v2383 = vmul.f32 %v2320, %v1287
    %v2384 = vmul.f32 %v2325, %v1288
    %v2385 = vmul.f32 %v2330, %v1289
    %v2386 = vmul.f32 %v2335, %v1290
    %v2387 = vmul.f32 %v2340, %v1291
    %v2388 = vmul.f32 %v2345, %v1292
    %v2389 = vmul.f32 %v2350, %v1293
    %v2390 = vmul.f32 %v2355, %v1294
    %v2391 = vmul.f32 %v2360, %v1295
    %v2392 = vmul.f32 %v2365, %v1296
    %v2393 = vmul.f32 %v2370, %v1297
    %v2394 = vmul.f32 %v2375, %v1298
    %v2395 = vsel %vm679, %v2379, 0.0
    %v2396 = vsel %vm679, %v2380, 0.0
    %v2397 = vadd.f32 %v2395, %v2396
    %v2398 = vrot.slane %v2397, 4
    %v2399 = vadd.f32 %v2397, %v2398
    %v2400 = vrot.slane %v2399, 2
    %v2401 = vadd.f32 %v2399, %v2400
    %v2402 = vrot.slane %v2401, 1
    %v2403 = vadd.f32 %v2401, %v2402
    %v2404 = vsel %vm679, %v2381, 0.0
    %v2405 = vsel %vm679, %v2382, 0.0
    %v2406 = vadd.f32 %v2404, %v2405
    %v2407 = vrot.slane %v2406, 4
    %v2408 = vadd.f32 %v2406, %v2407
    %v2409 = vrot.slane %v2408, 2
    %v2410 = vadd.f32 %v2408, %v2409
    %v2411 = vrot.slane %v2410, 1
    %v2412 = vadd.f32 %v2410, %v2411
    %v2413 = vsel %vm679, %v2383, 0.0
    %v2414 = vsel %vm679, %v2384, 0.0
    %v2415 = vadd.f32 %v2413, %v2414
    %v2416 = vrot.slane %v2415, 4
    %v2417 = vadd.f32 %v2415, %v2416
    %v2418 = vrot.slane %v2417, 2
    %v2419 = vadd.f32 %v2417, %v2418
    %v2420 = vrot.slane %v2419, 1
    %v2421 = vadd.f32 %v2419, %v2420
    %v2422 = vsel %vm679, %v2385, 0.0
    %v2423 = vsel %vm679, %v2386, 0.0
    %v2424 = vadd.f32 %v2422, %v2423
    %v2425 = vrot.slane %v2424, 4
    %v2426 = vadd.f32 %v2424, %v2425
    %v2427 = vrot.slane %v2426, 2
    %v2428 = vadd.f32 %v2426, %v2427
    %v2429 = vrot.slane %v2428, 1
    %v2430 = vadd.f32 %v2428, %v2429
    %v2431 = vsel %vm679, %v2387, 0.0
    %v2432 = vsel %vm679, %v2388, 0.0
    %v2433 = vadd.f32 %v2431, %v2432
    %v2434 = vrot.slane %v2433, 4
    %v2435 = vadd.f32 %v2433, %v2434
    %v2436 = vrot.slane %v2435, 2
    %v2437 = vadd.f32 %v2435, %v2436
    %v2438 = vrot.slane %v2437, 1
    %v2439 = vadd.f32 %v2437, %v2438
    %v2440 = vsel %vm679, %v2389, 0.0
    %v2441 = vsel %vm679, %v2390, 0.0
    %v2442 = vadd.f32 %v2440, %v2441
    %v2443 = vrot.slane %v2442, 4
    %v2444 = vadd.f32 %v2442, %v2443
    %v2445 = vrot.slane %v2444, 2
    %v2446 = vadd.f32 %v2444, %v2445
    %v2447 = vrot.slane %v2446, 1
    %v2448 = vadd.f32 %v2446, %v2447
    %v2449 = vsel %vm679, %v2391, 0.0
    %v2450 = vsel %vm679, %v2392, 0.0
    %v2451 = vadd.f32 %v2449, %v2450
    %v2452 = vrot.slane %v2451, 4
    %v2453 = vadd.f32 %v2451, %v2452
    %v2454 = vrot.slane %v2453, 2
    %v2455 = vadd.f32 %v2453, %v2454
    %v2456 = vrot.slane %v2455, 1
    %v2457 = vadd.f32 %v2455, %v2456
    %v2458 = vsel %vm679, %v2393, 0.0
    %v2459 = vsel %vm679, %v2394, 0.0
    %v2460 = vadd.f32 %v2458, %v2459
    %v2461 = vrot.slane %v2460, 4
    %v2462 = vadd.f32 %v2460, %v2461
    %v2463 = vrot.slane %v2462, 2
    %v2464 = vadd.f32 %v2462, %v2463
    %v2465 = vrot.slane %v2464, 1
    %v2466 = vadd.f32 %v2464, %v2465
    %v2475 = vsel %vm665, %v2412, %v2403
    %v2476 = vsel %vm667, %v2421, %v2475
    %v2477 = vsel %vm669, %v2430, %v2476
    %v2478 = vsel %vm671, %v2439, %v2477
    %v2479 = vsel %vm673, %v2448, %v2478
    %v2480 = vsel %vm675, %v2457, %v2479
    %v2481 = vsel %vm677, %v2466, %v2480
    %v2483 = vadd.f32 %v2378, %v2481
    %v2484 = vld [vmem:[%s7] sm:$0xff]
    %v2485 = vld [vmem:[%s7 + $0x8] sm:$0xff]
    %v2486 = vld [vmem:[%s7 + $0x10] sm:$0xff]
    %v2487 = vld [vmem:[%s7 + $0x18] sm:$0xff]
    %v2488 = vld [vmem:[%s8] sm:$0x1]
    %v2490 = vlaneseq
    %v2491 = vshrl.u32 %v2490, 7
    %v2492 = vsub.s32 0, %v2491
    %v2493 = vrot.slane %v2488, %v2492
    %v2496 = vsel %vm679, %v2483, 0
    %2498 = vmatprep.subr.mxu0 0.0
    %2499 = vmatpush1.msra.mxu0 %v2484
    %2500 = vmatprep.subr.mxu0 0.0
    %2501 = vmatpush1.msra.mxu0 %v2485
    %2502 = vmatprep.subr.mxu0 0.0
    %2503 = vmatpush1.msra.mxu0 %v2486
    %2504 = vmatprep.subr.mxu0 0.0
    %2505 = vmatpush1.msra.mxu0 %v2487
    %2506 = vmatprep.subr.mxu0 0.0
    %2507 = vmatpush1.msra.mxu0 0.0
    %2508 = vmatprep.subr.mxu0 0.0
    %2509 = vmatpush1.msra.mxu0 0.0
    %2510 = vmatprep.subr.mxu0 0.0
    %2511 = vmatpush1.msra.mxu0 0.0
    %2512 = vmatprep.subr.mxu0 0.0
    %2513 = vmatpush1.msra.mxu0 0.0
    %2514 = vmatprep.subr.mxu0 0.0
    %2515 = vmatpush1.msra.mxu0 0.0
    %2516 = vmatprep.subr.mxu0 0.0
    %2517 = vmatpush1.msra.mxu0 0.0
    %2518 = vmatprep.subr.mxu0 0.0
    %2519 = vmatpush1.msra.mxu0 0.0
    %2520 = vmatprep.subr.mxu0 0.0
    %2521 = vmatpush1.msra.mxu0 0.0
    %2522 = vmatprep.subr.mxu0 0.0
    %2523 = vmatpush1.msra.mxu0 0.0
    %2524 = vmatprep.subr.mxu0 0.0
    %2525 = vmatpush1.msra.mxu0 0.0
    %2526 = vmatprep.subr.mxu0 0.0
    %2527 = vmatpush1.msra.mxu0 0.0
    %2528 = vmatprep.subr.mxu0 0.0
    %2529 = vmatpush1.msra.mxu0 0.0
    %2530 = vmatprep.subr.mxu0 0.0
    %2531 = vmatpush1.msra.mxu0 0.0
    %2532 = vmatprep.subr.mxu0 0.0
    %2533 = vmatpush1.msra.mxu0 0.0
    %2534 = vmatprep.subr.mxu0 0.0
    %2535 = vmatpush1.msra.mxu0 0.0
    %2536 = vmatprep.subr.mxu0 0.0
    %2537 = vmatpush1.msra.mxu0 0.0
    %2538 = vmatprep.subr.mxu0 0.0
    %2539 = vmatpush1.msra.mxu0 0.0
    %2540 = vmatprep.subr.mxu0 0.0
    %2541 = vmatpush1.msra.mxu0 0.0
    %2542 = vmatprep.subr.mxu0 0.0
    %2543 = vmatpush1.msra.mxu0 0.0
    %2544 = vmatprep.subr.mxu0 0.0
    %2545 = vmatpush1.msra.mxu0 0.0
    %2546 = vmatprep.subr.mxu0 0.0
    %2547 = vmatpush1.msra.mxu0 0.0
    %2548 = vmatprep.subr.mxu0 0.0
    %2549 = vmatpush1.msra.mxu0 0.0
    %2550 = vmatprep.subr.mxu0 0.0
    %2551 = vmatpush1.msra.mxu0 0.0
    %2552 = vmatprep.subr.mxu0 0.0
    %2553 = vmatpush1.msra.mxu0 0.0
    %2554 = vmatprep.subr.mxu0 0.0
    %2555 = vmatpush1.msra.mxu0 0.0
    %2556 = vmatprep.subr.mxu0 0.0
    %2557 = vmatpush1.msra.mxu0 0.0
    %2558 = vmatprep.subr.mxu0 0.0
    %2559 = vmatpush1.msra.mxu0 0.0
    %2560 = vmatprep.subr.mxu0 0.0
    %2561 = vmatpush1.msra.mxu0 0.0
    %2562 = vmatprep.mubr.f32.mxu0 0.0
    %2563 = vmatmul.mubr.f32.gmra.mrb[0].mxu0 %v2496
    %v2564 = vpop.f32.mrb[0].mxu0
    %v2565 = vadd.f32 %v2493, %v2564
    %v2566 = vpop.f32.mrb[0].mxu0
    %2567 = vdwg.mxu0
    %2568 = vst [vmem:[#allocation2] sm:$0xff] %v2565
    // Predicated region
    $region46: #{tpu_custom_call.1} parent=1 // pred_check
      _
    $region47: #{tpu_custom_call.1} parent=1 // pred_check_branch
      %2570 = sbr.rel (0) target = $region49
    $region48: #{tpu_custom_call.1} parent=1 // pred_region
      %s2572 = ssub.s32 128, 128
      %2573 = vsyncadd [#allocation3], %s2572
      %s2575 = sshll.u32 [#allocation2], 4
      %s2576 = int_to_ptr.vmem [resolvable:$true] %s2575
      %2578 = dma.vmem_to_hbm [thread:$0]  %s2576, 128, %s11, [#allocation3]
    $region49: #{tpu_custom_call.1} parent=1 // pred_fallthru
      _
    // Predicated region
    $region50: #{tpu_custom_call.1} parent=1 // pred_check
      _
    $region51: #{tpu_custom_call.1} parent=1 // pred_check_branch
      %2580 = sbr.rel (0) target = $region53
    $region52: #{tpu_custom_call.1} parent=1 // pred_region
      %2581 = dma.done [#allocation3], 128
    $region53: #{tpu_custom_call.1} parent=1 // pred_fallthru
      _
    %2582 = vsyncpa [#allocation3], 1

</llo_original>
